<compile_context>
chip_gen: v7x
topology: tpu7x:2x2x1
jax: 0.10.0
libtpu: 0.0.40
codegen_flags: <defaults>
</compile_context>

<pallas_src>
import functools

import jax
import jax.numpy as jnp
from jax import lax
from jax.experimental import pallas as pl
from jax.experimental.pallas import tpu as pltpu

LANES = 128


def _convblock_kernel(x_ref, w1_ref, g1_ref, be1_ref,
                      w2_ref, g2_ref, be2_ref,
                      w3_ref, b3_ref,
                      o_ref, *,
                      n_channels, kernel_size, dilation, padding, eps,
                      mm_dtype, gelu_approx, packed):
    B, T, Cp = x_ref.shape
    C = n_channels
    K = kernel_size
    N = B * T
    inv_n = 1.0 / N

    def gelu(v):
        if gelu_approx:
            # tanh approximation rides the EUP slot (prefer on v5e: no bf16 VALU there).
            return 0.5 * v * (1.0 + jnp.tanh(0.7978845608028654 * (v + 0.044715 * v * v * v)))
        return 0.5 * v * (1.0 + lax.erf(v * 0.7071067811865476))  # exact nn.GELU()

    # Per-row time index of the flattened (B*T, Cp) activation, kept as an (N,1) column
    # so the K-1 boundary masks are tiny and broadcast along lanes for free.
    t_idx = lax.broadcasted_iota(jnp.int32, (N, 1), 0) % T
    shifts = [k * dilation - padding for k in range(K)]
    masks = [None if s == 0 else
             ((t_idx + s >= 0) & (t_idx + s < T)).astype(jnp.float32)
             for s in shifts]

    def taps(v):
        # K time-shifted (N, Cp) f32 copies of v, zeroed outside the valid conv range
        # (handles both the zero padding and batch boundaries of the flattened layout).
        out = []
        for s, m in zip(shifts, masks):
            if s == 0:
                out.append(v)
            else:
                out.append(pltpu.roll(v, shift=(-s) % N, axis=0) * m)
        return out

    def conv(v_f32, w_ref):
        """Dilated 'same' Conv1d (no bias) as MXU matmuls."""
        tap_list = taps(v_f32)
        if packed:
            # K*C <= 128: place tap k's C channels at lanes [k*C, (k+1)*C) (the padded
            # lanes >= C are provably zero), so the whole conv is ONE matmul with a
            # dense 128-wide reduction dim instead of K lane-padded ones.
            cols = tap_list[0]
            for k in range(1, K):
                cols = cols + pltpu.roll(tap_list[k], shift=k * C, axis=1)
            return jnp.dot(cols.astype(mm_dtype), w_ref[...],
                           preferred_element_type=jnp.float32)
        # General path: per-tap matmuls accumulated in f32; no (N, K*Cp) buffer.
        # TODO(synk): on v7x, drive the MRB directly (matmul_push_rhs/acc_lhs/pop) so the
        # K-tap accumulation happens in the MXU result buffer instead of VPU adds.
        acc = jnp.dot(tap_list[0].astype(mm_dtype), w_ref[0],
                      preferred_element_type=jnp.float32)
        for k in range(1, K):
            acc = acc + jnp.dot(tap_list[k].astype(mm_dtype), w_ref[k],
                                preferred_element_type=jnp.float32)
        return acc

    def bn_gelu(y, g_ref, be_ref):
        # Training-mode BatchNorm (biased batch variance) folded to one scale/shift.
        # Mean-shifted variance avoids the E[x^2]-E[x]^2 cancellation; data is resident
        # so the second pass is essentially free.
        mean = jnp.sum(y, axis=0, keepdims=True) * inv_n
        d = y - mean
        var = jnp.sum(d * d, axis=0, keepdims=True) * inv_n
        scale = g_ref[...] * lax.rsqrt(var + eps)
        shift = be_ref[...] - mean * scale
        return gelu(y * scale + shift)

    x_f32 = x_ref[...].reshape(N, Cp).astype(jnp.float32)   # x loaded from VMEM once

    # conv1 (bias cancelled exactly by BN) -> BN -> GELU -> skip
    y1 = bn_gelu(conv(x_f32, w1_ref), g1_ref, be1_ref) + x_f32
    # conv2 (bias cancelled exactly by BN) -> BN -> GELU -> skip
    y2 = bn_gelu(conv(y1, w2_ref), g2_ref, be2_ref) + y1
    # conv3: "a" and "gate" GLU halves fused into one 2*Cp-wide matmul (keeps the
    # 256-wide MXU full on v6e/v7x); the lane-128 split below is vreg-aligned and free.
    h3 = conv(y2, w3_ref) + b3_ref[...]
    a = h3[:, :Cp]
    g = h3[:, Cp:]
    out = a * jax.nn.sigmoid(g)

    o_ref[...] = out.reshape(B, T, Cp).astype(o_ref.dtype)


def conv_block_forward(x_ncl, params, *, kernel_size, dilation, padding, eps=1e-5,
                       use_bf16_matmul=True, gelu_approx=False, out_dtype=jnp.float32):
    """x_ncl: (B, C, T) like PyTorch. Returns (B, C, T)."""
    B, C, T = x_ncl.shape
    K = kernel_size
    assert 2 * padding == dilation * (K - 1), \
        "residual connections require a same-length convolution"

    Cp = ((C + LANES - 1) // LANES) * LANES      # lane-dense channel count
    cpad = Cp - C
    mm_dtype = jnp.bfloat16 if use_bf16_matmul else jnp.float32
    packed = (K * C <= LANES)                    # small-C path: one lane group holds all taps

    # NCL -> NLC, channels zero-padded so the kernel's lane axis is dense. Shipping x in
    # the matmul dtype halves its HBM->VMEM DMA on the bf16 path.
    # TODO(synk): if the surrounding model can run NLC / bf16 end-to-end, drop these
    # wrapper transposes + casts (they are full-array HBM round trips).
    x = jnp.transpose(x_ncl, (0, 2, 1)).astype(mm_dtype)
    if cpad:
        x = jnp.pad(x, ((0, 0), (0, 0), (0, cpad)))

    def prep_w(w_oik):
        # PyTorch (Cout, Cin, K) -> tap-major matmul layout.
        wt = jnp.transpose(w_oik, (2, 1, 0)).astype(jnp.float32)      # (K, Cin, Cout)
        if packed:
            w = wt.reshape(K * C, w_oik.shape[0])                     # rows = (tap, cin)
            return jnp.pad(w, ((0, LANES - K * C), (0, 0)))           # (128, Cout)
        return jnp.pad(wt, ((0, 0), (0, cpad), (0, 0)))               # (K, Cp, Cout)

    def pad_cols(w):
        return jnp.pad(w, [(0, 0)] * (w.ndim - 1) + [(0, Cp - w.shape[-1])])

    def prep_vec(v):
        v = v.astype(jnp.float32)
        if cpad:
            v = jnp.pad(v, (0, cpad))
        return v[None, :]

    w3, b3 = params["w3"], params["b3"]
    # conv3 "a"/"gate" halves fused column-wise -> (.., 2*Cp) RHS.
    w3f = jnp.concatenate([pad_cols(prep_w(w3[:C])), pad_cols(prep_w(w3[C:]))],
                          axis=-1).astype(mm_dtype)
    b3f = jnp.concatenate([prep_vec(b3[:C]), prep_vec(b3[C:])], axis=-1)
    w1 = pad_cols(prep_w(params["w1"])).astype(mm_dtype)
    w2 = pad_cols(prep_w(params["w2"])).astype(mm_dtype)

    # conv1/conv2 biases are intentionally NOT passed: training-mode BatchNorm cancels them.
    args = (
        x,
        w1, prep_vec(params["gamma1"]), prep_vec(params["beta1"]),
        w2, prep_vec(params["gamma2"]), prep_vec(params["beta2"]),
        w3f, b3f,
    )

    # Per-generation VMEM budget (v7x has 64 MiB physical per TC; v5e/v6e have 128 MiB).
    try:
        vmem_cap = int(pltpu.get_tpu_info().vmem_capacity_bytes)
    except Exception:
        vmem_cap = 64 * 1024 * 1024
    vmem_limit = int(min(vmem_cap * 3 // 4, 100 * 1024 * 1024))

    def full_spec(shape):
        n = len(shape)
        return pl.BlockSpec(shape, lambda i, n=n: (0,) * n)

    kernel = functools.partial(
        _convblock_kernel, n_channels=C, kernel_size=K, dilation=dilation,
        padding=padding, eps=eps, mm_dtype=mm_dtype, gelu_approx=gelu_approx,
        packed=packed)

    # TODO(synk): for production B*T, tile T on a 'parallel' grid axis (halo of
    # dilation*(K-1)), switch BN to a two-pass partial sum/sumsq scheme, keep the
    # weight/gamma/beta specs on a constant index_map so they stay resident, and size
    # the tile against the per-generation VMEM budget above (also engages the second
    # v7x TensorCore); at these demo shapes one resident block is fastest.
    out_nlc = pl.pallas_call(
        kernel,
        out_shape=jax.ShapeDtypeStruct((B, T, Cp), out_dtype),
        grid=(1,),
        in_specs=[full_spec(a.shape) for a in args],
        out_specs=full_spec((B, T, Cp)),
        compiler_params=pltpu.CompilerParams(
            dimension_semantics=("arbitrary",),
            vmem_limit_bytes=vmem_limit),
    )(*args)

    return jnp.transpose(out_nlc[:, :, :C], (0, 2, 1))


def conv_block_reference(x, params, *, dilation, padding, eps=1e-5):
    """Pure-JAX f32 reference matching the PyTorch forward (NCL layout)."""
    def conv1d(v, w, b):
        y = lax.conv_general_dilated(v, w, window_strides=(1,),
                                     padding=[(padding, padding)],
                                     rhs_dilation=(dilation,),
                                     dimension_numbers=("NCH", "OIH", "NCH"))
        return y + b[None, :, None]

    def bn(v, g, beta):
        mean = v.mean(axis=(0, 2), keepdims=True)
        var = ((v - mean) ** 2).mean(axis=(0, 2), keepdims=True)
        return (g[None, :, None] * (v - mean) / jnp.sqrt(var + eps)
                + beta[None, :, None])

    gelu = lambda v: 0.5 * v * (1.0 + lax.erf(v / jnp.sqrt(2.0)))

    h = gelu(bn(conv1d(x, params["w1"], params["b1"]),
                params["gamma1"], params["beta1"])) + x
    h2 = gelu(bn(conv1d(h, params["w2"], params["b2"]),
                 params["gamma2"], params["beta2"])) + h
    h3 = conv1d(h2, params["w3"], params["b3"])
    a, g = jnp.split(h3, 2, axis=1)
    return a * jax.nn.sigmoid(g)


def _make_params(key, C, K):
    ks = jax.random.split(key, 10)
    return {
        "w1": 0.1 * jax.random.normal(ks[0], (C, C, K), jnp.float32),
        "b1": 0.1 * jax.random.normal(ks[1], (C,), jnp.float32),
        "gamma1": 1.0 + 0.1 * jax.random.normal(ks[2], (C,), jnp.float32),
        "beta1": 0.1 * jax.random.normal(ks[3], (C,), jnp.float32),
        "w2": 0.1 * jax.random.normal(ks[4], (C, C, K), jnp.float32),
        "b2": 0.1 * jax.random.normal(ks[5], (C,), jnp.float32),
        "gamma2": 1.0 + 0.1 * jax.random.normal(ks[6], (C,), jnp.float32),
        "beta2": 0.1 * jax.random.normal(ks[7], (C,), jnp.float32),
        "w3": 0.1 * jax.random.normal(ks[8], (2 * C, C, K), jnp.float32),
        "b3": 0.1 * jax.random.normal(ks[9], (2 * C,), jnp.float32),
    }


if __name__ == "__main__":
    K, DIL, PADDING = 3, 2, 2       # same-length conv: 2*padding == dilation*(K-1)

    def check(tag, B, C, T, key):
        kp, kx = jax.random.split(key)
        params = _make_params(kp, C, K)
        x = jax.random.normal(kx, (B, C, T), jnp.float32)

        ref = jax.block_until_ready(
            conv_block_reference(x, params, dilation=DIL, padding=PADDING))
        scale = float(jnp.max(jnp.abs(ref)))

        # Strict semantic check: f32-matmul path must match the PyTorch-equivalent ref.
        out_f32 = jax.block_until_ready(conv_block_forward(
            x, params, kernel_size=K, dilation=DIL, padding=PADDING,
            use_bf16_matmul=False))
        assert out_f32.shape == (B, C, T), out_f32.shape
        err32 = float(jnp.max(jnp.abs(out_f32 - ref)))
        assert err32 < 2e-3, f"{tag}: f32 path max abs err {err32}"

        # Fast path: bf16 MXU operands / bf16 x DMA with f32 accumulation.
        out_bf16 = jax.block_until_ready(conv_block_forward(
            x, params, kernel_size=K, dilation=DIL, padding=PADDING,
            use_bf16_matmul=True))
        assert out_bf16.shape == (B, C, T), out_bf16.shape
        err16 = float(jnp.max(jnp.abs(out_bf16 - ref)))
        tol16 = 1.5e-1 + 2.5e-2 * scale
        assert err16 < tol16, f"{tag}: bf16 path max abs err {err16} (tol {tol16})"

    key = jax.random.PRNGKey(0)
    k1, k2 = jax.random.split(key)
    # Small C exercises the packed (K*C <= 128) single-lane-group path.
    check("packed C=16", 2, 16, 32, k1)
    # C = 128 exercises the per-tap accumulated-matmul path (no lane padding waste).
    check("per-tap C=128", 2, 128, 32, k2)

    print("KERNEL_OK")
</pallas_src>

<mosaic_0001>
module attributes {stable_mosaic.version = 11 : i64} {
  func.func @_convblock_kernel(%arg0: i32, %arg1: memref<2x32x128xf32, #tpu.memory_space<vmem>>, %arg2: memref<128x128xf32, #tpu.memory_space<vmem>>, %arg3: memref<1x128xf32, #tpu.memory_space<vmem>>, %arg4: memref<1x128xf32, #tpu.memory_space<vmem>>, %arg5: memref<128x128xf32, #tpu.memory_space<vmem>>, %arg6: memref<1x128xf32, #tpu.memory_space<vmem>>, %arg7: memref<1x128xf32, #tpu.memory_space<vmem>>, %arg8: memref<128x256xf32, #tpu.memory_space<vmem>>, %arg9: memref<1x256xf32, #tpu.memory_space<vmem>>, %arg10: memref<2x32x128xf32, #tpu.memory_space<vmem>>) attributes {dimension_semantics = [#tpu.dimension_semantics<arbitrary>], iteration_bounds = array<i64: 1>, scalar_prefetch = 0 : i64, scratch_operands = 0 : i64, tpu.core_type = #tpu.core_type<tc>, window_params = [{pipeline_mode = #tpu.pipeline_mode<synchronous>, transform_indices = @transform_0, window_bounds = array<i64: 2, 32, 128>}, {pipeline_mode = #tpu.pipeline_mode<synchronous>, transform_indices = @transform_1, window_bounds = array<i64: 128, 128>}, {pipeline_mode = #tpu.pipeline_mode<synchronous>, transform_indices = @transform_2, window_bounds = array<i64: 1, 128>}, {pipeline_mode = #tpu.pipeline_mode<synchronous>, transform_indices = @transform_3, window_bounds = array<i64: 1, 128>}, {pipeline_mode = #tpu.pipeline_mode<synchronous>, transform_indices = @transform_4, window_bounds = array<i64: 128, 128>}, {pipeline_mode = #tpu.pipeline_mode<synchronous>, transform_indices = @transform_5, window_bounds = array<i64: 1, 128>}, {pipeline_mode = #tpu.pipeline_mode<synchronous>, transform_indices = @transform_6, window_bounds = array<i64: 1, 128>}, {pipeline_mode = #tpu.pipeline_mode<synchronous>, transform_indices = @transform_7, window_bounds = array<i64: 128, 256>}, {pipeline_mode = #tpu.pipeline_mode<synchronous>, transform_indices = @transform_8, window_bounds = array<i64: 1, 256>}, {pipeline_mode = #tpu.pipeline_mode<synchronous>, transform_indices = @transform_9, window_bounds = array<i64: 2, 32, 128>}]} {
    %0 = tpu.iota {dimensions = array<i32: 0>} : vector<64x1xi32>
    %c32_i32 = arith.constant 32 : i32
    %c0_i32 = arith.constant 0 : i32
    %1 = arith.cmpi eq, %c32_i32, %c0_i32 : i32
    %c1_i32 = arith.constant 1 : i32
    %2 = arith.select %1, %c1_i32, %c32_i32 : i32
    %3 = vector.broadcast %2 : i32 to vector<64x1xi32>
    %4 = arith.remsi %0, %3 : vector<64x1xi32>
    %c0_i32_0 = arith.constant 0 : i32
    %5 = vector.broadcast %c0_i32_0 : i32 to vector<64x1xi32>
    %6 = arith.cmpi ne, %4, %5 : vector<64x1xi32>
    %c0_i32_1 = arith.constant 0 : i32
    %7 = vector.broadcast %c0_i32_1 : i32 to vector<64x1xi32>
    %8 = arith.cmpi slt, %4, %7 : vector<64x1xi32>
    %c0_i32_2 = arith.constant 0 : i32
    %9 = arith.cmpi slt, %2, %c0_i32_2 : i32
    %10 = vector.broadcast %9 : i1 to vector<64x1xi1>
    %11 = vector.broadcast %10 : vector<64x1xi1> to vector<64x1xi1>
    %12 = arith.xori %8, %11 : vector<64x1xi1>
    %13 = arith.andi %12, %6 : vector<64x1xi1>
    %14 = vector.broadcast %2 : i32 to vector<64x1xi32>
    %15 = arith.addi %4, %14 : vector<64x1xi32>
    %16 = arith.select %13, %15, %4 : vector<64x1xi1>, vector<64x1xi32>
    %c-2_i32 = arith.constant -2 : i32
    %17 = vector.broadcast %c-2_i32 : i32 to vector<64x1xi32>
    %18 = arith.addi %16, %17 : vector<64x1xi32>
    %c0_i32_3 = arith.constant 0 : i32
    %19 = vector.broadcast %c0_i32_3 : i32 to vector<64x1xi32>
    %20 = arith.cmpi sge, %18, %19 : vector<64x1xi32>
    %c-2_i32_4 = arith.constant -2 : i32
    %21 = vector.broadcast %c-2_i32_4 : i32 to vector<64x1xi32>
    %22 = arith.addi %16, %21 : vector<64x1xi32>
    %c32_i32_5 = arith.constant 32 : i32
    %23 = vector.broadcast %c32_i32_5 : i32 to vector<64x1xi32>
    %24 = arith.cmpi slt, %22, %23 : vector<64x1xi32>
    %25 = arith.andi %20, %24 : vector<64x1xi1>
    %26 = arith.extui %25 : vector<64x1xi1> to vector<64x1xi32>
    %27 = arith.sitofp %26 : vector<64x1xi32> to vector<64x1xf32>
    %c2_i32 = arith.constant 2 : i32
    %28 = vector.broadcast %c2_i32 : i32 to vector<64x1xi32>
    %29 = arith.addi %16, %28 : vector<64x1xi32>
    %c0_i32_6 = arith.constant 0 : i32
    %30 = vector.broadcast %c0_i32_6 : i32 to vector<64x1xi32>
    %31 = arith.cmpi sge, %29, %30 : vector<64x1xi32>
    %c2_i32_7 = arith.constant 2 : i32
    %32 = vector.broadcast %c2_i32_7 : i32 to vector<64x1xi32>
    %33 = arith.addi %16, %32 : vector<64x1xi32>
    %c32_i32_8 = arith.constant 32 : i32
    %34 = vector.broadcast %c32_i32_8 : i32 to vector<64x1xi32>
    %35 = arith.cmpi slt, %33, %34 : vector<64x1xi32>
    %36 = arith.andi %31, %35 : vector<64x1xi1>
    %37 = arith.extui %36 : vector<64x1xi1> to vector<64x1xi32>
    %38 = arith.sitofp %37 : vector<64x1xi32> to vector<64x1xf32>
    %c0 = arith.constant 0 : index
    %c0_9 = arith.constant 0 : index
    %c0_10 = arith.constant 0 : index
    %39 = vector.load %arg1[%c0, %c0_9, %c0_10] : memref<2x32x128xf32, #tpu.memory_space<vmem>>, vector<2x32x128xf32>
    %40 = vector.shape_cast %39 : vector<2x32x128xf32> to vector<64x128xf32>
    %c2_i32_11 = arith.constant 2 : i32
    %41 = tpu.dynamic_rotate %40 by %c2_i32_11 dim 0 : vector<64x128xf32>, i32 -> vector<64x128xf32>
    %42 = vector.broadcast %27 : vector<64x1xf32> to vector<64x128xf32>
    %43 = arith.mulf %41, %42 : vector<64x128xf32>
    %c62_i32 = arith.constant 62 : i32
    %44 = tpu.dynamic_rotate %40 by %c62_i32 dim 0 : vector<64x128xf32>, i32 -> vector<64x128xf32>
    %45 = vector.broadcast %38 : vector<64x1xf32> to vector<64x128xf32>
    %46 = arith.mulf %44, %45 : vector<64x128xf32>
    %c16_i32 = arith.constant 16 : i32
    %47 = tpu.dynamic_rotate %40 by %c16_i32 dim 1 : vector<64x128xf32>, i32 -> vector<64x128xf32>
    %48 = arith.addf %43, %47 : vector<64x128xf32>
    %c32_i32_12 = arith.constant 32 : i32
    %49 = tpu.dynamic_rotate %46 by %c32_i32_12 dim 1 : vector<64x128xf32>, i32 -> vector<64x128xf32>
    %50 = arith.addf %48, %49 : vector<64x128xf32>
    %c0_13 = arith.constant 0 : index
    %c0_14 = arith.constant 0 : index
    %51 = vector.load %arg2[%c0_13, %c0_14] : memref<128x128xf32, #tpu.memory_space<vmem>>, vector<128x128xf32>
    %cst = arith.constant dense<0.000000e+00> : vector<64x128xf32>
    %52 = tpu.matmul %50, %51, %cst {dimension_numbers = #tpu.dot_dimension_numbers<[1], [0], [0], [1], [0, 0, 1, 1], [], []>} : vector<64x128xf32>, vector<128x128xf32>, vector<64x128xf32> -> vector<64x128xf32>
    %cst_15 = arith.constant dense<0.000000e+00> : vector<128xf32>
    %53 = vector.multi_reduction <add>, %52, %cst_15 [0] : vector<64x128xf32> to vector<128xf32>
    %54 = vector.shape_cast %53 : vector<128xf32> to vector<1x128xf32>
    %cst_16 = arith.constant 1.562500e-02 : f32
    %55 = vector.broadcast %cst_16 : f32 to vector<1x128xf32>
    %56 = arith.mulf %54, %55 : vector<1x128xf32>
    %57 = vector.broadcast %56 : vector<1x128xf32> to vector<64x128xf32>
    %58 = arith.subf %52, %57 : vector<64x128xf32>
    %59 = arith.mulf %58, %58 : vector<64x128xf32>
    %cst_17 = arith.constant dense<0.000000e+00> : vector<128xf32>
    %60 = vector.multi_reduction <add>, %59, %cst_17 [0] : vector<64x128xf32> to vector<128xf32>
    %61 = vector.shape_cast %60 : vector<128xf32> to vector<1x128xf32>
    %cst_18 = arith.constant 1.562500e-02 : f32
    %62 = vector.broadcast %cst_18 : f32 to vector<1x128xf32>
    %63 = arith.mulf %61, %62 : vector<1x128xf32>
    %c0_19 = arith.constant 0 : index
    %c0_20 = arith.constant 0 : index
    %64 = vector.load %arg3[%c0_19, %c0_20] : memref<1x128xf32, #tpu.memory_space<vmem>>, vector<1x128xf32>
    %cst_21 = arith.constant 9.99999974E-6 : f32
    %65 = vector.broadcast %cst_21 : f32 to vector<1x128xf32>
    %66 = arith.addf %63, %65 : vector<1x128xf32>
    %67 = math.rsqrt %66 : vector<1x128xf32>
    %68 = arith.mulf %64, %67 : vector<1x128xf32>
    %c0_22 = arith.constant 0 : index
    %c0_23 = arith.constant 0 : index
    %69 = vector.load %arg4[%c0_22, %c0_23] : memref<1x128xf32, #tpu.memory_space<vmem>>, vector<1x128xf32>
    %70 = arith.mulf %56, %68 : vector<1x128xf32>
    %71 = arith.subf %69, %70 : vector<1x128xf32>
    %72 = vector.broadcast %68 : vector<1x128xf32> to vector<64x128xf32>
    %73 = arith.mulf %52, %72 : vector<64x128xf32>
    %74 = vector.broadcast %71 : vector<1x128xf32> to vector<64x128xf32>
    %75 = arith.addf %73, %74 : vector<64x128xf32>
    %cst_24 = arith.constant 5.000000e-01 : f32
    %76 = vector.broadcast %cst_24 : f32 to vector<64x128xf32>
    %77 = arith.mulf %76, %75 : vector<64x128xf32>
    %cst_25 = arith.constant 0.707106769 : f32
    %78 = vector.broadcast %cst_25 : f32 to vector<64x128xf32>
    %79 = arith.mulf %75, %78 : vector<64x128xf32>
    %80 = math.erf %79 : vector<64x128xf32>
    %cst_26 = arith.constant 1.000000e+00 : f32
    %81 = vector.broadcast %cst_26 : f32 to vector<64x128xf32>
    %82 = arith.addf %81, %80 : vector<64x128xf32>
    %83 = arith.mulf %77, %82 : vector<64x128xf32>
    %84 = arith.addf %83, %40 : vector<64x128xf32>
    %c2_i32_27 = arith.constant 2 : i32
    %85 = tpu.dynamic_rotate %84 by %c2_i32_27 dim 0 : vector<64x128xf32>, i32 -> vector<64x128xf32>
    %86 = vector.broadcast %27 : vector<64x1xf32> to vector<64x128xf32>
    %87 = arith.mulf %85, %86 : vector<64x128xf32>
    %c62_i32_28 = arith.constant 62 : i32
    %88 = tpu.dynamic_rotate %84 by %c62_i32_28 dim 0 : vector<64x128xf32>, i32 -> vector<64x128xf32>
    %89 = vector.broadcast %38 : vector<64x1xf32> to vector<64x128xf32>
    %90 = arith.mulf %88, %89 : vector<64x128xf32>
    %c16_i32_29 = arith.constant 16 : i32
    %91 = tpu.dynamic_rotate %84 by %c16_i32_29 dim 1 : vector<64x128xf32>, i32 -> vector<64x128xf32>
    %92 = arith.addf %87, %91 : vector<64x128xf32>
    %c32_i32_30 = arith.constant 32 : i32
    %93 = tpu.dynamic_rotate %90 by %c32_i32_30 dim 1 : vector<64x128xf32>, i32 -> vector<64x128xf32>
    %94 = arith.addf %92, %93 : vector<64x128xf32>
    %c0_31 = arith.constant 0 : index
    %c0_32 = arith.constant 0 : index
    %95 = vector.load %arg5[%c0_31, %c0_32] : memref<128x128xf32, #tpu.memory_space<vmem>>, vector<128x128xf32>
    %cst_33 = arith.constant dense<0.000000e+00> : vector<64x128xf32>
    %96 = tpu.matmul %94, %95, %cst_33 {dimension_numbers = #tpu.dot_dimension_numbers<[1], [0], [0], [1], [0, 0, 1, 1], [], []>} : vector<64x128xf32>, vector<128x128xf32>, vector<64x128xf32> -> vector<64x128xf32>
    %cst_34 = arith.constant dense<0.000000e+00> : vector<128xf32>
    %97 = vector.multi_reduction <add>, %96, %cst_34 [0] : vector<64x128xf32> to vector<128xf32>
    %98 = vector.shape_cast %97 : vector<128xf32> to vector<1x128xf32>
    %cst_35 = arith.constant 1.562500e-02 : f32
    %99 = vector.broadcast %cst_35 : f32 to vector<1x128xf32>
    %100 = arith.mulf %98, %99 : vector<1x128xf32>
    %101 = vector.broadcast %100 : vector<1x128xf32> to vector<64x128xf32>
    %102 = arith.subf %96, %101 : vector<64x128xf32>
    %103 = arith.mulf %102, %102 : vector<64x128xf32>
    %cst_36 = arith.constant dense<0.000000e+00> : vector<128xf32>
    %104 = vector.multi_reduction <add>, %103, %cst_36 [0] : vector<64x128xf32> to vector<128xf32>
    %105 = vector.shape_cast %104 : vector<128xf32> to vector<1x128xf32>
    %cst_37 = arith.constant 1.562500e-02 : f32
    %106 = vector.broadcast %cst_37 : f32 to vector<1x128xf32>
    %107 = arith.mulf %105, %106 : vector<1x128xf32>
    %c0_38 = arith.constant 0 : index
    %c0_39 = arith.constant 0 : index
    %108 = vector.load %arg6[%c0_38, %c0_39] : memref<1x128xf32, #tpu.memory_space<vmem>>, vector<1x128xf32>
    %cst_40 = arith.constant 9.99999974E-6 : f32
    %109 = vector.broadcast %cst_40 : f32 to vector<1x128xf32>
    %110 = arith.addf %107, %109 : vector<1x128xf32>
    %111 = math.rsqrt %110 : vector<1x128xf32>
    %112 = arith.mulf %108, %111 : vector<1x128xf32>
    %c0_41 = arith.constant 0 : index
    %c0_42 = arith.constant 0 : index
    %113 = vector.load %arg7[%c0_41, %c0_42] : memref<1x128xf32, #tpu.memory_space<vmem>>, vector<1x128xf32>
    %114 = arith.mulf %100, %112 : vector<1x128xf32>
    %115 = arith.subf %113, %114 : vector<1x128xf32>
    %116 = vector.broadcast %112 : vector<1x128xf32> to vector<64x128xf32>
    %117 = arith.mulf %96, %116 : vector<64x128xf32>
    %118 = vector.broadcast %115 : vector<1x128xf32> to vector<64x128xf32>
    %119 = arith.addf %117, %118 : vector<64x128xf32>
    %cst_43 = arith.constant 5.000000e-01 : f32
    %120 = vector.broadcast %cst_43 : f32 to vector<64x128xf32>
    %121 = arith.mulf %120, %119 : vector<64x128xf32>
    %cst_44 = arith.constant 0.707106769 : f32
    %122 = vector.broadcast %cst_44 : f32 to vector<64x128xf32>
    %123 = arith.mulf %119, %122 : vector<64x128xf32>
    %124 = math.erf %123 : vector<64x128xf32>
    %cst_45 = arith.constant 1.000000e+00 : f32
    %125 = vector.broadcast %cst_45 : f32 to vector<64x128xf32>
    %126 = arith.addf %125, %124 : vector<64x128xf32>
    %127 = arith.mulf %121, %126 : vector<64x128xf32>
    %128 = arith.addf %127, %84 : vector<64x128xf32>
    %c2_i32_46 = arith.constant 2 : i32
    %129 = tpu.dynamic_rotate %128 by %c2_i32_46 dim 0 : vector<64x128xf32>, i32 -> vector<64x128xf32>
    %130 = vector.broadcast %27 : vector<64x1xf32> to vector<64x128xf32>
    %131 = arith.mulf %129, %130 : vector<64x128xf32>
    %c62_i32_47 = arith.constant 62 : i32
    %132 = tpu.dynamic_rotate %128 by %c62_i32_47 dim 0 : vector<64x128xf32>, i32 -> vector<64x128xf32>
    %133 = vector.broadcast %38 : vector<64x1xf32> to vector<64x128xf32>
    %134 = arith.mulf %132, %133 : vector<64x128xf32>
    %c16_i32_48 = arith.constant 16 : i32
    %135 = tpu.dynamic_rotate %128 by %c16_i32_48 dim 1 : vector<64x128xf32>, i32 -> vector<64x128xf32>
    %136 = arith.addf %131, %135 : vector<64x128xf32>
    %c32_i32_49 = arith.constant 32 : i32
    %137 = tpu.dynamic_rotate %134 by %c32_i32_49 dim 1 : vector<64x128xf32>, i32 -> vector<64x128xf32>
    %138 = arith.addf %136, %137 : vector<64x128xf32>
    %c0_50 = arith.constant 0 : index
    %c0_51 = arith.constant 0 : index
    %139 = vector.load %arg8[%c0_50, %c0_51] : memref<128x256xf32, #tpu.memory_space<vmem>>, vector<128x256xf32>
    %cst_52 = arith.constant dense<0.000000e+00> : vector<64x256xf32>
    %140 = tpu.matmul %138, %139, %cst_52 {dimension_numbers = #tpu.dot_dimension_numbers<[1], [0], [0], [1], [0, 0, 1, 1], [], []>} : vector<64x128xf32>, vector<128x256xf32>, vector<64x256xf32> -> vector<64x256xf32>
    %c0_53 = arith.constant 0 : index
    %c0_54 = arith.constant 0 : index
    %141 = vector.load %arg9[%c0_53, %c0_54] : memref<1x256xf32, #tpu.memory_space<vmem>>, vector<1x256xf32>
    %142 = vector.broadcast %141 : vector<1x256xf32> to vector<64x256xf32>
    %143 = arith.addf %140, %142 : vector<64x256xf32>
    %144 = vector.extract_strided_slice %143 {offsets = [0, 0], sizes = [64, 128], strides = [1, 1]} : vector<64x256xf32> to vector<64x128xf32>
    %145 = vector.extract_strided_slice %143 {offsets = [0, 128], sizes = [64, 128], strides = [1, 1]} : vector<64x256xf32> to vector<64x128xf32>
    %146 = arith.negf %145 : vector<64x128xf32>
    %147 = math.exp %146 : vector<64x128xf32>
    %cst_55 = arith.constant 1.000000e+00 : f32
    %148 = vector.broadcast %cst_55 : f32 to vector<64x128xf32>
    %149 = arith.addf %148, %147 : vector<64x128xf32>
    %150 = arith.divf %148, %149 : vector<64x128xf32>
    %151 = arith.mulf %144, %150 : vector<64x128xf32>
    %152 = vector.shape_cast %151 : vector<64x128xf32> to vector<2x32x128xf32>
    %c0_56 = arith.constant 0 : index
    %c0_57 = arith.constant 0 : index
    %c0_58 = arith.constant 0 : index
    %153 = vector.load %arg10[%c0_56, %c0_57, %c0_58] : memref<2x32x128xf32, #tpu.memory_space<vmem>>, vector<2x32x128xf32>
    tpu.vector_store %arg10[%c0_56, %c0_57, %c0_58], %152 {strides = array<i32>} : memref<2x32x128xf32, #tpu.memory_space<vmem>>, vector<2x32x128xf32>,
    return
  }
  func.func @transform_0(%arg0: i32) -> (i32, i32, i32) {
    %c0_i32 = arith.constant 0 : i32
    %c0_i32_0 = arith.constant 0 : i32
    %c0_i32_1 = arith.constant 0 : i32
    %c0_i32_2 = arith.constant 0 : i32
    return %c0_i32, %c0_i32_0, %c0_i32_1 : i32, i32, i32
  }
  func.func @transform_1(%arg0: i32) -> (i32, i32) {
    %c0_i32 = arith.constant 0 : i32
    %c0_i32_0 = arith.constant 0 : i32
    %c0_i32_1 = arith.constant 0 : i32
    return %c0_i32, %c0_i32_0 : i32, i32
  }
  func.func @transform_2(%arg0: i32) -> (i32, i32) {
    %c0_i32 = arith.constant 0 : i32
    %c0_i32_0 = arith.constant 0 : i32
    %c0_i32_1 = arith.constant 0 : i32
    return %c0_i32, %c0_i32_0 : i32, i32
  }
  func.func @transform_3(%arg0: i32) -> (i32, i32) {
    %c0_i32 = arith.constant 0 : i32
    %c0_i32_0 = arith.constant 0 : i32
    %c0_i32_1 = arith.constant 0 : i32
    return %c0_i32, %c0_i32_0 : i32, i32
  }
  func.func @transform_4(%arg0: i32) -> (i32, i32) {
    %c0_i32 = arith.constant 0 : i32
    %c0_i32_0 = arith.constant 0 : i32
    %c0_i32_1 = arith.constant 0 : i32
    return %c0_i32, %c0_i32_0 : i32, i32
  }
  func.func @transform_5(%arg0: i32) -> (i32, i32) {
    %c0_i32 = arith.constant 0 : i32
    %c0_i32_0 = arith.constant 0 : i32
    %c0_i32_1 = arith.constant 0 : i32
    return %c0_i32, %c0_i32_0 : i32, i32
  }
  func.func @transform_6(%arg0: i32) -> (i32, i32) {
    %c0_i32 = arith.constant 0 : i32
    %c0_i32_0 = arith.constant 0 : i32
    %c0_i32_1 = arith.constant 0 : i32
    return %c0_i32, %c0_i32_0 : i32, i32
  }
  func.func @transform_7(%arg0: i32) -> (i32, i32) {
    %c0_i32 = arith.constant 0 : i32
    %c0_i32_0 = arith.constant 0 : i32
    %c0_i32_1 = arith.constant 0 : i32
    return %c0_i32, %c0_i32_0 : i32, i32
  }
  func.func @transform_8(%arg0: i32) -> (i32, i32) {
    %c0_i32 = arith.constant 0 : i32
    %c0_i32_0 = arith.constant 0 : i32
    %c0_i32_1 = arith.constant 0 : i32
    return %c0_i32, %c0_i32_0 : i32, i32
  }
  func.func @transform_9(%arg0: i32) -> (i32, i32, i32) {
    %c0_i32 = arith.constant 0 : i32
    %c0_i32_0 = arith.constant 0 : i32
    %c0_i32_1 = arith.constant 0 : i32
    %c0_i32_2 = arith.constant 0 : i32
    return %c0_i32, %c0_i32_0, %c0_i32_1 : i32, i32, i32
  }
}

</mosaic_0001>

<llo_original>
// kernel: tpu_custom_call.1
$region0: #{tpu_custom_call.1}
  #allocation0 [shape = 'u32[]', space=smem, size = 0x4, offset = 0x4, fixed_abs, tag = 'smem constant byte address 0x4 - core index']
  #allocation1 [shape = 'u32[144,128]{1,0:T(1,128)}', space=vmem, size = 0x12000, scoped, tag = 'internal scratch']
  %s0 = inlined_call_operand.hbm [shape: f32[2,32,128], index: 0, kind: input, shape index: {}]
  %s1 = inlined_call_operand.hbm [shape: f32[128,128], index: 1, kind: input, shape index: {}]
  %s2 = inlined_call_operand.vmem [shape: f32[1,128], index: 2, kind: input, shape index: {}]
  %s3 = inlined_call_operand.vmem [shape: f32[1,128], index: 3, kind: input, shape index: {}]
  %s4 = inlined_call_operand.hbm [shape: f32[128,128], index: 4, kind: input, shape index: {}]
  %s5 = inlined_call_operand.vmem [shape: f32[1,128], index: 5, kind: input, shape index: {}]
  %s6 = inlined_call_operand.vmem [shape: f32[1,128], index: 6, kind: input, shape index: {}]
  %s7 = inlined_call_operand.hbm [shape: f32[128,256], index: 7, kind: input, shape index: {}]
  %s8 = inlined_call_operand.vmem [shape: f32[1,256], index: 8, kind: input, shape index: {}]
  %s9 = inlined_call_operand.hbm [shape: f32[2,32,128], index: 9, kind: output, shape index: {}]
  %s10 = sld [smem:[#allocation0]]
  $region62: #{tpu_custom_call.1} parent=0
    _
  %s12 = ssub.s32 1, %s10
  %s13 = scalar_select 0, %s12, %s10
  $region1: #{tpu_custom_call.1} parent=0
    #allocation2 [shape = 'u8[32768]{0}', space=vmem, size = 0x8000, scoped, tag = 'input window, operand 0, single buffered']
    #allocation3 [shape = 's32[1]{0}', space=sflag, size = 0x4, scoped, tag = 'scoped memory for tpu_custom_call.1']
    #allocation4 [shape = 's32[1]{0}', space=sflag, size = 0x4, scoped, tag = 'scoped memory for tpu_custom_call.1']
    #allocation5 [shape = 'u8[65536]{0}', space=vmem, size = 0x10000, scoped, tag = 'input window, operand 1, single buffered']
    #allocation6 [shape = 's32[1]{0}', space=sflag, size = 0x4, scoped, tag = 'scoped memory for tpu_custom_call.1']
    #allocation7 [shape = 'u8[65536]{0}', space=vmem, size = 0x10000, scoped, tag = 'input window, operand 4, single buffered']
    #allocation8 [shape = 'u8[131072]{0}', space=vmem, size = 0x20000, scoped, tag = 'input window, operand 7, single buffered']
    #allocation9 [shape = 's32[1]{0}', space=sflag, size = 0x4, scoped, tag = 'scoped memory for tpu_custom_call.1']
    #allocation10 [shape = 'u8[32768]{0}', space=vmem, size = 0x8000, scoped, tag = 'output window, operand 0, single buffered']
    %14 = vsyncpa [#allocation3], 0
    %15 = vsyncpa [#allocation6], 0
    %16 = vsyncpa [#allocation9], 0
    %17 = vsyncpa [#allocation4], 0
    // Predicated region
    $region2: #{tpu_custom_call.1} parent=1 // pred_check
      _
    $region3: #{tpu_custom_call.1} parent=1 // pred_check_branch
      %19 = sbr.rel (0) target = $region5
    $region4: #{tpu_custom_call.1} parent=1 // pred_region
      %s21 = ssub.s32 1024, 1024
      %22 = vsyncadd [#allocation3], %s21
      %s23 = sshll.u32 [#allocation2], 4
      %s24 = int_to_ptr.vmem [resolvable:$true] %s23
      %29 = dma.hbm_to_vmem [thread:$0]  %s0, 1024, %s24, [#allocation3], 128, 128, 8
    $region5: #{tpu_custom_call.1} parent=1 // pred_fallthru
      _
    // Predicated region
    $region6: #{tpu_custom_call.1} parent=1 // pred_check
      _
    $region7: #{tpu_custom_call.1} parent=1 // pred_check_branch
      %31 = sbr.rel (0) target = $region9
    $region8: #{tpu_custom_call.1} parent=1 // pred_region
      %s33 = ssub.s32 2048, 2048
      %34 = vsyncadd [#allocation6], %s33
      %s35 = sshll.u32 [#allocation5], 4
      %s36 = int_to_ptr.vmem [resolvable:$true] %s35
      %41 = dma.hbm_to_vmem [thread:$0]  %s1, 2048, %s36, [#allocation6], 128, 128, 8
    $region9: #{tpu_custom_call.1} parent=1 // pred_fallthru
      _
    // Predicated region
    $region10: #{tpu_custom_call.1} parent=1 // pred_check
      _
    $region11: #{tpu_custom_call.1} parent=1 // pred_check_branch
      %43 = sbr.rel (0) target = $region13
    $region12: #{tpu_custom_call.1} parent=1 // pred_region
      _
    $region13: #{tpu_custom_call.1} parent=1 // pred_fallthru
      _
    // Predicated region
    $region14: #{tpu_custom_call.1} parent=1 // pred_check
      _
    $region15: #{tpu_custom_call.1} parent=1 // pred_check_branch
      %45 = sbr.rel (0) target = $region17
    $region16: #{tpu_custom_call.1} parent=1 // pred_region
      _
    $region17: #{tpu_custom_call.1} parent=1 // pred_fallthru
      _
    // Predicated region
    $region18: #{tpu_custom_call.1} parent=1 // pred_check
      _
    $region19: #{tpu_custom_call.1} parent=1 // pred_check_branch
      %47 = sbr.rel (0) target = $region21
    $region20: #{tpu_custom_call.1} parent=1 // pred_region
      %s49 = ssub.s32 2048, 2048
      %50 = vsyncadd [#allocation6], %s49
      %s51 = sshll.u32 [#allocation7], 4
      %s52 = int_to_ptr.vmem [resolvable:$true] %s51
      %57 = dma.hbm_to_vmem [thread:$0]  %s4, 2048, %s52, [#allocation6], 128, 128, 8
    $region21: #{tpu_custom_call.1} parent=1 // pred_fallthru
      _
    // Predicated region
    $region22: #{tpu_custom_call.1} parent=1 // pred_check
      _
    $region23: #{tpu_custom_call.1} parent=1 // pred_check_branch
      %59 = sbr.rel (0) target = $region25
    $region24: #{tpu_custom_call.1} parent=1 // pred_region
      _
    $region25: #{tpu_custom_call.1} parent=1 // pred_fallthru
      _
    // Predicated region
    $region26: #{tpu_custom_call.1} parent=1 // pred_check
      _
    $region27: #{tpu_custom_call.1} parent=1 // pred_check_branch
      %61 = sbr.rel (0) target = $region29
    $region28: #{tpu_custom_call.1} parent=1 // pred_region
      _
    $region29: #{tpu_custom_call.1} parent=1 // pred_fallthru
      _
    // Predicated region
    $region30: #{tpu_custom_call.1} parent=1 // pred_check
      _
    $region31: #{tpu_custom_call.1} parent=1 // pred_check_branch
      %63 = sbr.rel (0) target = $region33
    $region32: #{tpu_custom_call.1} parent=1 // pred_region
      %s65 = ssub.s32 4096, 4096
      %66 = vsyncadd [#allocation9], %s65
      %s67 = sshll.u32 [#allocation8], 4
      %s68 = int_to_ptr.vmem [resolvable:$true] %s67
      %73 = dma.hbm_to_vmem [thread:$0]  %s7, 4096, %s68, [#allocation9], 256, 256, 16
    $region33: #{tpu_custom_call.1} parent=1 // pred_fallthru
      _
    // Predicated region
    $region34: #{tpu_custom_call.1} parent=1 // pred_check
      _
    $region35: #{tpu_custom_call.1} parent=1 // pred_check_branch
      %75 = sbr.rel (0) target = $region37
    $region36: #{tpu_custom_call.1} parent=1 // pred_region
      _
    $region37: #{tpu_custom_call.1} parent=1 // pred_fallthru
      _
    // Predicated region
    $region38: #{tpu_custom_call.1} parent=1 // pred_check
      _
    $region39: #{tpu_custom_call.1} parent=1 // pred_check_branch
      %77 = sbr.rel (0) target = $region41
    $region40: #{tpu_custom_call.1} parent=1 // pred_region
      %78 = dma.done [#allocation3], 1024
    $region41: #{tpu_custom_call.1} parent=1 // pred_fallthru
      _
    // Predicated region
    $region42: #{tpu_custom_call.1} parent=1 // pred_check
      _
    $region43: #{tpu_custom_call.1} parent=1 // pred_check_branch
      %80 = sbr.rel (0) target = $region45
    $region44: #{tpu_custom_call.1} parent=1 // pred_region
      %81 = dma.done [#allocation6], 2048
    $region45: #{tpu_custom_call.1} parent=1 // pred_fallthru
      _
    // Predicated region
    $region46: #{tpu_custom_call.1} parent=1 // pred_check
      _
    $region47: #{tpu_custom_call.1} parent=1 // pred_check_branch
      %83 = sbr.rel (0) target = $region49
    $region48: #{tpu_custom_call.1} parent=1 // pred_region
      %84 = dma.done [#allocation6], 2048
    $region49: #{tpu_custom_call.1} parent=1 // pred_fallthru
      _
    // Predicated region
    $region50: #{tpu_custom_call.1} parent=1 // pred_check
      _
    $region51: #{tpu_custom_call.1} parent=1 // pred_check_branch
      %86 = sbr.rel (0) target = $region53
    $region52: #{tpu_custom_call.1} parent=1 // pred_region
      %87 = dma.done [#allocation9], 4096
    $region53: #{tpu_custom_call.1} parent=1 // pred_fallthru
      _
    %v88 = vlaneseq
    %v89 = vshrl.u32 %v88, 7
    %v90 = vadd.s32 %v89, 8
    %v91 = vadd.s32 %v89, 16
    %v92 = vadd.s32 %v89, 24
    %v93 = vadd.s32 %v89, 32
    %v94 = vadd.s32 %v89, 40
    %v95 = vadd.s32 %v89, 48
    %v96 = vadd.s32 %v89, 56
    %vm97 = vcmp.lt.s32.totalorder %v89, 0
    %v98 = vsub.s32 0, %v89
    %v99 = vsel %vm97, %v98, %v89
    %v100 = vshrl.u32 %v99, 5
    %v101 = vand.u32 %v99, 31
    %v102 = vsub.s32 0, %v101
    %v103 = vsel %vm97, %v102, %v101
    %vm104 = vcmp.lt.s32.totalorder %v90, 0
    %v105 = vsub.s32 0, %v90
    %v106 = vsel %vm104, %v105, %v90
    %v107 = vshrl.u32 %v106, 5
    %v108 = vand.u32 %v106, 31
    %v109 = vsub.s32 0, %v108
    %v110 = vsel %vm104, %v109, %v108
    %vm111 = vcmp.lt.s32.totalorder %v91, 0
    %v112 = vsub.s32 0, %v91
    %v113 = vsel %vm111, %v112, %v91
    %v114 = vshrl.u32 %v113, 5
    %v115 = vand.u32 %v113, 31
    %v116 = vsub.s32 0, %v115
    %v117 = vsel %vm111, %v116, %v115
    %vm118 = vcmp.lt.s32.totalorder %v92, 0
    %v119 = vsub.s32 0, %v92
    %v120 = vsel %vm118, %v119, %v92
    %v121 = vshrl.u32 %v120, 5
    %v122 = vand.u32 %v120, 31
    %v123 = vsub.s32 0, %v122
    %v124 = vsel %vm118, %v123, %v122
    %vm125 = vcmp.lt.s32.totalorder %v93, 0
    %v126 = vsub.s32 0, %v93
    %v127 = vsel %vm125, %v126, %v93
    %v128 = vshrl.u32 %v127, 5
    %v129 = vand.u32 %v127, 31
    %v130 = vsub.s32 0, %v129
    %v131 = vsel %vm125, %v130, %v129
    %vm132 = vcmp.lt.s32.totalorder %v94, 0
    %v133 = vsub.s32 0, %v94
    %v134 = vsel %vm132, %v133, %v94
    %v135 = vshrl.u32 %v134, 5
    %v136 = vand.u32 %v134, 31
    %v137 = vsub.s32 0, %v136
    %v138 = vsel %vm132, %v137, %v136
    %vm139 = vcmp.lt.s32.totalorder %v95, 0
    %v140 = vsub.s32 0, %v95
    %v141 = vsel %vm139, %v140, %v95
    %v142 = vshrl.u32 %v141, 5
    %v143 = vand.u32 %v141, 31
    %v144 = vsub.s32 0, %v143
    %v145 = vsel %vm139, %v144, %v143
    %vm146 = vcmp.lt.s32.totalorder %v96, 0
    %v147 = vsub.s32 0, %v96
    %v148 = vsel %vm146, %v147, %v96
    %v149 = vshrl.u32 %v148, 5
    %v150 = vand.u32 %v148, 31
    %v151 = vsub.s32 0, %v150
    %v152 = vsel %vm146, %v151, %v150
    %vm153 = vcmp.ne.s32.totalorder %v103, 0
    %vm154 = vcmp.ne.s32.totalorder %v110, 0
    %vm155 = vcmp.ne.s32.totalorder %v117, 0
    %vm156 = vcmp.ne.s32.totalorder %v124, 0
    %vm157 = vcmp.ne.s32.totalorder %v131, 0
    %vm158 = vcmp.ne.s32.totalorder %v138, 0
    %vm159 = vcmp.ne.s32.totalorder %v145, 0
    %vm160 = vcmp.ne.s32.totalorder %v152, 0
    %vm161 = vcmp.lt.s32.totalorder %v103, 0
    %vm162 = vcmp.lt.s32.totalorder %v110, 0
    %vm163 = vcmp.lt.s32.totalorder %v117, 0
    %vm164 = vcmp.lt.s32.totalorder %v124, 0
    %vm165 = vcmp.lt.s32.totalorder %v131, 0
    %vm166 = vcmp.lt.s32.totalorder %v138, 0
    %vm167 = vcmp.lt.s32.totalorder %v145, 0
    %vm168 = vcmp.lt.s32.totalorder %v152, 0
    %vm169 = vmand %vm161, %vm153
    %vm170 = vmand %vm162, %vm154
    %vm171 = vmand %vm163, %vm155
    %vm172 = vmand %vm164, %vm156
    %vm173 = vmand %vm165, %vm157
    %vm174 = vmand %vm166, %vm158
    %vm175 = vmand %vm167, %vm159
    %vm176 = vmand %vm168, %vm160
    %v177 = vadd.s32 %v103, 32
    %v178 = vadd.s32 %v110, 32
    %v179 = vadd.s32 %v117, 32
    %v180 = vadd.s32 %v124, 32
    %v181 = vadd.s32 %v131, 32
    %v182 = vadd.s32 %v138, 32
    %v183 = vadd.s32 %v145, 32
    %v184 = vadd.s32 %v152, 32
    %v185 = vsel %vm169, %v177, %v103
    %v186 = vsel %vm170, %v178, %v110
    %v187 = vsel %vm171, %v179, %v117
    %v188 = vsel %vm172, %v180, %v124
    %v189 = vsel %vm173, %v181, %v131
    %v190 = vsel %vm174, %v182, %v138
    %v191 = vsel %vm175, %v183, %v145
    %v192 = vsel %vm176, %v184, %v152
    %v193 = vadd.s32 %v185, 4294967294
    %v194 = vadd.s32 %v186, 4294967294
    %v195 = vadd.s32 %v187, 4294967294
    %v196 = vadd.s32 %v188, 4294967294
    %v197 = vadd.s32 %v189, 4294967294
    %v198 = vadd.s32 %v190, 4294967294
    %v199 = vadd.s32 %v191, 4294967294
    %v200 = vadd.s32 %v192, 4294967294
    %vm201 = vcmp.ge.s32.totalorder %v193, 0
    %vm202 = vcmp.ge.s32.totalorder %v194, 0
    %vm203 = vcmp.ge.s32.totalorder %v195, 0
    %vm204 = vcmp.ge.s32.totalorder %v196, 0
    %vm205 = vcmp.ge.s32.totalorder %v197, 0
    %vm206 = vcmp.ge.s32.totalorder %v198, 0
    %vm207 = vcmp.ge.s32.totalorder %v199, 0
    %vm208 = vcmp.ge.s32.totalorder %v200, 0
    %vm209 = vcmp.lt.s32.totalorder %v193, 32
    %vm210 = vcmp.lt.s32.totalorder %v194, 32
    %vm211 = vcmp.lt.s32.totalorder %v195, 32
    %vm212 = vcmp.lt.s32.totalorder %v196, 32
    %vm213 = vcmp.lt.s32.totalorder %v197, 32
    %vm214 = vcmp.lt.s32.totalorder %v198, 32
    %vm215 = vcmp.lt.s32.totalorder %v199, 32
    %vm216 = vcmp.lt.s32.totalorder %v200, 32
    %vm217 = vmand %vm201, %vm209
    %vm218 = vmand %vm202, %vm210
    %vm219 = vmand %vm203, %vm211
    %vm220 = vmand %vm204, %vm212
    %vm221 = vmand %vm205, %vm213
    %vm222 = vmand %vm206, %vm214
    %vm223 = vmand %vm207, %vm215
    %vm224 = vmand %vm208, %vm216
    %v225 = vsel %vm217, 1, 0
    %v226 = vsel %vm218, 1, 0
    %v227 = vsel %vm219, 1, 0
    %v228 = vsel %vm220, 1, 0
    %v229 = vsel %vm221, 1, 0
    %v230 = vsel %vm222, 1, 0
    %v231 = vsel %vm223, 1, 0
    %v232 = vsel %vm224, 1, 0
    %v233 = vcvt.s32.f32 %v225
    %v234 = vcvt.s32.f32 %v226
    %v235 = vcvt.s32.f32 %v227
    %v236 = vcvt.s32.f32 %v228
    %v237 = vcvt.s32.f32 %v229
    %v238 = vcvt.s32.f32 %v230
    %v239 = vcvt.s32.f32 %v231
    %v240 = vcvt.s32.f32 %v232
    %v241 = vadd.s32 %v185, 2
    %v242 = vadd.s32 %v186, 2
    %v243 = vadd.s32 %v187, 2
    %v244 = vadd.s32 %v188, 2
    %v245 = vadd.s32 %v189, 2
    %v246 = vadd.s32 %v190, 2
    %v247 = vadd.s32 %v191, 2
    %v248 = vadd.s32 %v192, 2
    %vm249 = vcmp.ge.s32.totalorder %v241, 0
    %vm250 = vcmp.ge.s32.totalorder %v242, 0
    %vm251 = vcmp.ge.s32.totalorder %v243, 0
    %vm252 = vcmp.ge.s32.totalorder %v244, 0
    %vm253 = vcmp.ge.s32.totalorder %v245, 0
    %vm254 = vcmp.ge.s32.totalorder %v246, 0
    %vm255 = vcmp.ge.s32.totalorder %v247, 0
    %vm256 = vcmp.ge.s32.totalorder %v248, 0
    %vm257 = vcmp.lt.s32.totalorder %v241, 32
    %vm258 = vcmp.lt.s32.totalorder %v242, 32
    %vm259 = vcmp.lt.s32.totalorder %v243, 32
    %vm260 = vcmp.lt.s32.totalorder %v244, 32
    %vm261 = vcmp.lt.s32.totalorder %v245, 32
    %vm262 = vcmp.lt.s32.totalorder %v246, 32
    %vm263 = vcmp.lt.s32.totalorder %v247, 32
    %vm264 = vcmp.lt.s32.totalorder %v248, 32
    %vm265 = vmand %vm249, %vm257
    %vm266 = vmand %vm250, %vm258
    %vm267 = vmand %vm251, %vm259
    %vm268 = vmand %vm252, %vm260
    %vm269 = vmand %vm253, %vm261
    %vm270 = vmand %vm254, %vm262
    %vm271 = vmand %vm255, %vm263
    %vm272 = vmand %vm256, %vm264
    %v273 = vsel %vm265, 1, 0
    %v274 = vsel %vm266, 1, 0
    %v275 = vsel %vm267, 1, 0
    %v276 = vsel %vm268, 1, 0
    %v277 = vsel %vm269, 1, 0
    %v278 = vsel %vm270, 1, 0
    %v279 = vsel %vm271, 1, 0
    %v280 = vsel %vm272, 1, 0
    %v281 = vcvt.s32.f32 %v273
    %v282 = vcvt.s32.f32 %v274
    %v283 = vcvt.s32.f32 %v275
    %v284 = vcvt.s32.f32 %v276
    %v285 = vcvt.s32.f32 %v277
    %v286 = vcvt.s32.f32 %v278
    %v287 = vcvt.s32.f32 %v279
    %v288 = vcvt.s32.f32 %v280
    %v289 = vld [vmem:[#allocation2] sm:$0xff]
    %v290 = vld [vmem:[#allocation2 + $0x8] sm:$0xff]
    %v291 = vld [vmem:[#allocation2 + $0x10] sm:$0xff]
    %v292 = vld [vmem:[#allocation2 + $0x18] sm:$0xff]
    %v293 = vld [vmem:[#allocation2 + $0x20] sm:$0xff]
    %v294 = vld [vmem:[#allocation2 + $0x28] sm:$0xff]
    %v295 = vld [vmem:[#allocation2 + $0x30] sm:$0xff]
    %v296 = vld [vmem:[#allocation2 + $0x38] sm:$0xff]
    %v297 = vrot.slane %v289, 6
    %v298 = vrot.slane %v290, 6
    %v299 = vrot.slane %v291, 6
    %v300 = vrot.slane %v292, 6
    %v301 = vrot.slane %v293, 6
    %v302 = vrot.slane %v294, 6
    %v303 = vrot.slane %v295, 6
    %v304 = vrot.slane %v296, 6
    %vm305 = vcmp.lt.s32.totalorder %v89, 2
    %v306 = vsel %vm305, %v303, %v304
    %v307 = vsel %vm305, %v302, %v303
    %v308 = vsel %vm305, %v301, %v302
    %v309 = vsel %vm305, %v300, %v301
    %v310 = vsel %vm305, %v299, %v300
    %v311 = vsel %vm305, %v298, %v299
    %v312 = vsel %vm305, %v297, %v298
    %v313 = vsel %vm305, %v304, %v297
    %v314 = vmul.f32 %v313, %v233
    %v315 = vmul.f32 %v312, %v234
    %v316 = vmul.f32 %v311, %v235
    %v317 = vmul.f32 %v310, %v236
    %v318 = vmul.f32 %v309, %v237
    %v319 = vmul.f32 %v308, %v238
    %v320 = vmul.f32 %v307, %v239
    %v321 = vmul.f32 %v306, %v240
    %v322 = vrot.slane %v289, 2
    %v323 = vrot.slane %v290, 2
    %v324 = vrot.slane %v291, 2
    %v325 = vrot.slane %v292, 2
    %v326 = vrot.slane %v293, 2
    %v327 = vrot.slane %v294, 2
    %v328 = vrot.slane %v295, 2
    %v329 = vrot.slane %v296, 2
    %vm330 = vcmp.lt.s32.totalorder %v89, 6
    %v331 = vsel %vm330, %v328, %v329
    %v332 = vsel %vm330, %v327, %v328
    %v333 = vsel %vm330, %v326, %v327
    %v334 = vsel %vm330, %v325, %v326
    %v335 = vsel %vm330, %v324, %v325
    %v336 = vsel %vm330, %v323, %v324
    %v337 = vsel %vm330, %v322, %v323
    %v338 = vsel %vm330, %v329, %v322
    %v339 = vmul.f32 %v337, %v281
    %v340 = vmul.f32 %v336, %v282
    %v341 = vmul.f32 %v335, %v283
    %v342 = vmul.f32 %v334, %v284
    %v343 = vmul.f32 %v333, %v285
    %v344 = vmul.f32 %v332, %v286
    %v345 = vmul.f32 %v331, %v287
    %v346 = vmul.f32 %v338, %v288
    %347 = vrot.lane.b32.xlu0 %v289, 16
    %v348 = vpop.permute.xlu0 %347
    %349 = vrot.lane.b32.xlu0 %v290, 16
    %v350 = vpop.permute.xlu0 %349
    %351 = vrot.lane.b32.xlu0 %v291, 16
    %v352 = vpop.permute.xlu0 %351
    %353 = vrot.lane.b32.xlu0 %v292, 16
    %v354 = vpop.permute.xlu0 %353
    %355 = vrot.lane.b32.xlu0 %v293, 16
    %v356 = vpop.permute.xlu0 %355
    %357 = vrot.lane.b32.xlu0 %v294, 16
    %v358 = vpop.permute.xlu0 %357
    %359 = vrot.lane.b32.xlu0 %v295, 16
    %v360 = vpop.permute.xlu0 %359
    %361 = vrot.lane.b32.xlu0 %v296, 16
    %v362 = vpop.permute.xlu0 %361
    %v363 = vadd.f32 %v314, %v348
    %v364 = vadd.f32 %v315, %v350
    %v365 = vadd.f32 %v316, %v352
    %v366 = vadd.f32 %v317, %v354
    %v367 = vadd.f32 %v318, %v356
    %v368 = vadd.f32 %v319, %v358
    %v369 = vadd.f32 %v320, %v360
    %v370 = vadd.f32 %v321, %v362
    %371 = vrot.lane.b32.xlu0 %v339, 32
    %v372 = vpop.permute.xlu0 %371
    %373 = vrot.lane.b32.xlu0 %v340, 32
    %v374 = vpop.permute.xlu0 %373
    %375 = vrot.lane.b32.xlu0 %v341, 32
    %v376 = vpop.permute.xlu0 %375
    %377 = vrot.lane.b32.xlu0 %v342, 32
    %v378 = vpop.permute.xlu0 %377
    %379 = vrot.lane.b32.xlu0 %v343, 32
    %v380 = vpop.permute.xlu0 %379
    %381 = vrot.lane.b32.xlu0 %v344, 32
    %v382 = vpop.permute.xlu0 %381
    %383 = vrot.lane.b32.xlu0 %v345, 32
    %v384 = vpop.permute.xlu0 %383
    %385 = vrot.lane.b32.xlu0 %v346, 32
    %v386 = vpop.permute.xlu0 %385
    %v387 = vadd.f32 %v363, %v372
    %v388 = vadd.f32 %v364, %v374
    %v389 = vadd.f32 %v365, %v376
    %v390 = vadd.f32 %v366, %v378
    %v391 = vadd.f32 %v367, %v380
    %v392 = vadd.f32 %v368, %v382
    %v393 = vadd.f32 %v369, %v384
    %v394 = vadd.f32 %v370, %v386
    %v395 = vld [vmem:[#allocation5] sm:$0xff]
    %v396 = vld [vmem:[#allocation5 + $0x8] sm:$0xff]
    %v397 = vld [vmem:[#allocation5 + $0x10] sm:$0xff]
    %v398 = vld [vmem:[#allocation5 + $0x18] sm:$0xff]
    %v399 = vld [vmem:[#allocation5 + $0x20] sm:$0xff]
    %v400 = vld [vmem:[#allocation5 + $0x28] sm:$0xff]
    %v401 = vld [vmem:[#allocation5 + $0x30] sm:$0xff]
    %v402 = vld [vmem:[#allocation5 + $0x38] sm:$0xff]
    %v403 = vld [vmem:[#allocation5 + $0x40] sm:$0xff]
    %v404 = vld [vmem:[#allocation5 + $0x48] sm:$0xff]
    %v405 = vld [vmem:[#allocation5 + $0x50] sm:$0xff]
    %v406 = vld [vmem:[#allocation5 + $0x58] sm:$0xff]
    %v407 = vld [vmem:[#allocation5 + $0x60] sm:$0xff]
    %v408 = vld [vmem:[#allocation5 + $0x68] sm:$0xff]
    %v409 = vld [vmem:[#allocation5 + $0x70] sm:$0xff]
    %v410 = vld [vmem:[#allocation5 + $0x78] sm:$0xff]
    %411 = vmatprep.subr.mxu0 0.0
    %412 = vmatpush1.msra.mxu0 %v395
    %413 = vmatprep.subr.mxu0 0.0
    %414 = vmatpush1.msra.mxu0 %v396
    %415 = vmatprep.subr.mxu0 0.0
    %416 = vmatpush1.msra.mxu0 %v397
    %417 = vmatprep.subr.mxu0 0.0
    %418 = vmatpush1.msra.mxu0 %v398
    %419 = vmatprep.subr.mxu0 0.0
    %420 = vmatpush1.msra.mxu0 %v399
    %421 = vmatprep.subr.mxu0 0.0
    %422 = vmatpush1.msra.mxu0 %v400
    %423 = vmatprep.subr.mxu0 0.0
    %424 = vmatpush1.msra.mxu0 %v401
    %425 = vmatprep.subr.mxu0 0.0
    %426 = vmatpush1.msra.mxu0 %v402
    %427 = vmatprep.subr.mxu0 0.0
    %428 = vmatpush1.msra.mxu0 %v403
    %429 = vmatprep.subr.mxu0 0.0
    %430 = vmatpush1.msra.mxu0 %v404
    %431 = vmatprep.subr.mxu0 0.0
    %432 = vmatpush1.msra.mxu0 %v405
    %433 = vmatprep.subr.mxu0 0.0
    %434 = vmatpush1.msra.mxu0 %v406
    %435 = vmatprep.subr.mxu0 0.0
    %436 = vmatpush1.msra.mxu0 %v407
    %437 = vmatprep.subr.mxu0 0.0
    %438 = vmatpush1.msra.mxu0 %v408
    %439 = vmatprep.subr.mxu0 0.0
    %440 = vmatpush1.msra.mxu0 %v409
    %441 = vmatprep.subr.mxu0 0.0
    %442 = vmatpush1.msra.mxu0 %v410
    %443 = vmatprep.subr.mxu0 0.0
    %444 = vmatpush1.msra.mxu0 0.0
    %445 = vmatprep.subr.mxu0 0.0
    %446 = vmatpush1.msra.mxu0 0.0
    %447 = vmatprep.subr.mxu0 0.0
    %448 = vmatpush1.msra.mxu0 0.0
    %449 = vmatprep.subr.mxu0 0.0
    %450 = vmatpush1.msra.mxu0 0.0
    %451 = vmatprep.subr.mxu0 0.0
    %452 = vmatpush1.msra.mxu0 0.0
    %453 = vmatprep.subr.mxu0 0.0
    %454 = vmatpush1.msra.mxu0 0.0
    %455 = vmatprep.subr.mxu0 0.0
    %456 = vmatpush1.msra.mxu0 0.0
    %457 = vmatprep.subr.mxu0 0.0
    %458 = vmatpush1.msra.mxu0 0.0
    %459 = vmatprep.subr.mxu0 0.0
    %460 = vmatpush1.msra.mxu0 0.0
    %461 = vmatprep.subr.mxu0 0.0
    %462 = vmatpush1.msra.mxu0 0.0
    %463 = vmatprep.subr.mxu0 0.0
    %464 = vmatpush1.msra.mxu0 0.0
    %465 = vmatprep.subr.mxu0 0.0
    %466 = vmatpush1.msra.mxu0 0.0
    %467 = vmatprep.subr.mxu0 0.0
    %468 = vmatpush1.msra.mxu0 0.0
    %469 = vmatprep.subr.mxu0 0.0
    %470 = vmatpush1.msra.mxu0 0.0
    %471 = vmatprep.subr.mxu0 0.0
    %472 = vmatpush1.msra.mxu0 0.0
    %473 = vmatprep.subr.mxu0 0.0
    %474 = vmatpush1.msra.mxu0 0.0
    %475 = vmatprep.mubr.f32.mxu0 0.0
    %476 = vmatmul.mubr.f32.gmra.mrb[0].mxu0 %v387
    %v477 = vpop.f32.mrb[0].mxu0
    %v478 = vadd.f32 0.0, %v477
    %v479 = vpop.f32.mrb[0].mxu0
    %480 = vmatprep.mubr.f32.mxu0 0.0
    %481 = vmatmul.mubr.f32.gmra.mrb[0].mxu0 %v388
    %v482 = vpop.f32.mrb[0].mxu0
    %v483 = vadd.f32 0.0, %v482
    %v484 = vpop.f32.mrb[0].mxu0
    %485 = vmatprep.mubr.f32.mxu0 0.0
    %486 = vmatmul.mubr.f32.gmra.mrb[0].mxu0 %v389
    %v487 = vpop.f32.mrb[0].mxu0
    %v488 = vadd.f32 0.0, %v487
    %v489 = vpop.f32.mrb[0].mxu0
    %490 = vmatprep.mubr.f32.mxu0 0.0
    %491 = vmatmul.mubr.f32.gmra.mrb[0].mxu0 %v390
    %v492 = vpop.f32.mrb[0].mxu0
    %v493 = vadd.f32 0.0, %v492
    %v494 = vpop.f32.mrb[0].mxu0
    %495 = vmatprep.mubr.f32.mxu0 0.0
    %496 = vmatmul.mubr.f32.gmra.mrb[0].mxu0 %v391
    %v497 = vpop.f32.mrb[0].mxu0
    %v498 = vadd.f32 0.0, %v497
    %v499 = vpop.f32.mrb[0].mxu0
    %500 = vmatprep.mubr.f32.mxu0 0.0
    %501 = vmatmul.mubr.f32.gmra.mrb[0].mxu0 %v392
    %v502 = vpop.f32.mrb[0].mxu0
    %v503 = vadd.f32 0.0, %v502
    %v504 = vpop.f32.mrb[0].mxu0
    %505 = vmatprep.mubr.f32.mxu0 0.0
    %506 = vmatmul.mubr.f32.gmra.mrb[0].mxu0 %v393
    %v507 = vpop.f32.mrb[0].mxu0
    %v508 = vadd.f32 0.0, %v507
    %v509 = vpop.f32.mrb[0].mxu0
    %510 = vmatprep.mubr.f32.mxu0 0.0
    %511 = vmatmul.mubr.f32.gmra.mrb[0].mxu0 %v394
    %v512 = vpop.f32.mrb[0].mxu0
    %v513 = vadd.f32 0.0, %v512
    %v514 = vpop.f32.mrb[0].mxu0
    %515 = vdwg.mxu0
    %v516 = vadd.f32 %v478, %v483
    %v517 = vadd.f32 %v516, %v488
    %v518 = vadd.f32 %v517, %v493
    %v519 = vadd.f32 %v518, %v498
    %v520 = vadd.f32 %v519, %v503
    %v521 = vadd.f32 %v520, %v508
    %v522 = vadd.f32 %v521, %v513
    %v523 = vrot.slane %v522, 4
    %v524 = vadd.f32 %v522, %v523
    %v525 = vrot.slane %v524, 2
    %v526 = vadd.f32 %v524, %v525
    %v527 = vrot.slane %v526, 1
    %v528 = vadd.f32 %v526, %v527
    %v529 = vmul.f32 %v528, 0.015625
    %v530 = vsub.f32 %v478, %v529
    %v531 = vsub.f32 %v483, %v529
    %v532 = vsub.f32 %v488, %v529
    %v533 = vsub.f32 %v493, %v529
    %v534 = vsub.f32 %v498, %v529
    %v535 = vsub.f32 %v503, %v529
    %v536 = vsub.f32 %v508, %v529
    %v537 = vsub.f32 %v513, %v529
    %v538 = vmul.f32 %v530, %v530
    %v539 = vmul.f32 %v531, %v531
    %v540 = vmul.f32 %v532, %v532
    %v541 = vmul.f32 %v533, %v533
    %v542 = vmul.f32 %v534, %v534
    %v543 = vmul.f32 %v535, %v535
    %v544 = vmul.f32 %v536, %v536
    %v545 = vmul.f32 %v537, %v537
    %v546 = vadd.f32 %v538, %v539
    %v547 = vadd.f32 %v546, %v540
    %v548 = vadd.f32 %v547, %v541
    %v549 = vadd.f32 %v548, %v542
    %v550 = vadd.f32 %v549, %v543
    %v551 = vadd.f32 %v550, %v544
    %v552 = vadd.f32 %v551, %v545
    %v553 = vrot.slane %v552, 4
    %v554 = vadd.f32 %v552, %v553
    %v555 = vrot.slane %v554, 2
    %v556 = vadd.f32 %v554, %v555
    %v557 = vrot.slane %v556, 1
    %v558 = vadd.f32 %v556, %v557
    %v559 = vmul.f32 %v558, 0.015625
    %v560 = vld [vmem:[%s2] sm:$0x1]
    %v561 = vadd.f32 %v559, 1e-05
    %v562 = vrsqrt.pop %v561
    %v563 = vmul.f32 %v560, %v562
    %v564 = vld [vmem:[%s3] sm:$0x1]
    %v565 = vmul.f32 %v529, %v563
    %v566 = vsub.f32 %v564, %v565
    %v568 = vlaneseq
    %v569 = vshrl.u32 %v568, 7
    %v570 = vsub.s32 0, %v569
    %v571 = vrot.slane %v563, %v570
    %v573 = vmul.f32 %v478, %v571
    %v574 = vmul.f32 %v483, %v571
    %v575 = vmul.f32 %v488, %v571
    %v576 = vmul.f32 %v493, %v571
    %v577 = vmul.f32 %v498, %v571
    %v578 = vmul.f32 %v503, %v571
    %v579 = vmul.f32 %v508, %v571
    %v580 = vmul.f32 %v513, %v571
    %v582 = vlaneseq
    %v583 = vshrl.u32 %v582, 7
    %v584 = vsub.s32 0, %v583
    %v585 = vrot.slane %v566, %v584
    %v587 = vadd.f32 %v573, %v585
    %v588 = vadd.f32 %v574, %v585
    %v589 = vadd.f32 %v575, %v585
    %v590 = vadd.f32 %v576, %v585
    %v591 = vadd.f32 %v577, %v585
    %v592 = vadd.f32 %v578, %v585
    %v593 = vadd.f32 %v579, %v585
    %v594 = vadd.f32 %v580, %v585
    %v595 = vmul.f32 %v587, 0.5
    %v596 = vmul.f32 %v588, 0.5
    %v597 = vmul.f32 %v589, 0.5
    %v598 = vmul.f32 %v590, 0.5
    %v599 = vmul.f32 %v591, 0.5
    %v600 = vmul.f32 %v592, 0.5
    %v601 = vmul.f32 %v593, 0.5
    %v602 = vmul.f32 %v594, 0.5
    %v603 = vmul.f32 %v587, 0.70710677
    %v604 = vmul.f32 %v588, 0.70710677
    %v605 = vmul.f32 %v589, 0.70710677
    %v606 = vmul.f32 %v590, 0.70710677
    %v607 = vmul.f32 %v591, 0.70710677
    %v608 = vmul.f32 %v592, 0.70710677
    %v609 = vmul.f32 %v593, 0.70710677
    %v610 = vmul.f32 %v594, 0.70710677
    %v611 = verf.f32.pop %v603
    %v612 = verf.f32.pop %v604
    %v613 = verf.f32.pop %v605
    %v614 = verf.f32.pop %v606
    %v615 = verf.f32.pop %v607
    %v616 = verf.f32.pop %v608
    %v617 = verf.f32.pop %v609
    %v618 = verf.f32.pop %v610
    %v619 = vadd.f32 %v611, 1.0
    %v620 = vadd.f32 %v612, 1.0
    %v621 = vadd.f32 %v613, 1.0
    %v622 = vadd.f32 %v614, 1.0
    %v623 = vadd.f32 %v615, 1.0
    %v624 = vadd.f32 %v616, 1.0
    %v625 = vadd.f32 %v617, 1.0
    %v626 = vadd.f32 %v618, 1.0
    %v627 = vmul.f32 %v595, %v619
    %v628 = vmul.f32 %v596, %v620
    %v629 = vmul.f32 %v597, %v621
    %v630 = vmul.f32 %v598, %v622
    %v631 = vmul.f32 %v599, %v623
    %v632 = vmul.f32 %v600, %v624
    %v633 = vmul.f32 %v601, %v625
    %v634 = vmul.f32 %v602, %v626
    %v635 = vadd.f32 %v627, %v289
    %v636 = vadd.f32 %v628, %v290
    %v637 = vadd.f32 %v629, %v291
    %v638 = vadd.f32 %v630, %v292
    %v639 = vadd.f32 %v631, %v293
    %v640 = vadd.f32 %v632, %v294
    %v641 = vadd.f32 %v633, %v295
    %v642 = vadd.f32 %v634, %v296
    %v643 = vrot.slane %v635, 6
    %v644 = vrot.slane %v636, 6
    %v645 = vrot.slane %v637, 6
    %v646 = vrot.slane %v638, 6
    %v647 = vrot.slane %v639, 6
    %v648 = vrot.slane %v640, 6
    %v649 = vrot.slane %v641, 6
    %v650 = vrot.slane %v642, 6
    %v651 = vsel %vm305, %v649, %v650
    %v652 = vsel %vm305, %v648, %v649
    %v653 = vsel %vm305, %v647, %v648
    %v654 = vsel %vm305, %v646, %v647
    %v655 = vsel %vm305, %v645, %v646
    %v656 = vsel %vm305, %v644, %v645
    %v657 = vsel %vm305, %v643, %v644
    %v658 = vsel %vm305, %v650, %v643
    %v659 = vmul.f32 %v658, %v233
    %v660 = vmul.f32 %v657, %v234
    %v661 = vmul.f32 %v656, %v235
    %v662 = vmul.f32 %v655, %v236
    %v663 = vmul.f32 %v654, %v237
    %v664 = vmul.f32 %v653, %v238
    %v665 = vmul.f32 %v652, %v239
    %v666 = vmul.f32 %v651, %v240
    %v667 = vrot.slane %v635, 2
    %v668 = vrot.slane %v636, 2
    %v669 = vrot.slane %v637, 2
    %v670 = vrot.slane %v638, 2
    %v671 = vrot.slane %v639, 2
    %v672 = vrot.slane %v640, 2
    %v673 = vrot.slane %v641, 2
    %v674 = vrot.slane %v642, 2
    %v675 = vsel %vm330, %v673, %v674
    %v676 = vsel %vm330, %v672, %v673
    %v677 = vsel %vm330, %v671, %v672
    %v678 = vsel %vm330, %v670, %v671
    %v679 = vsel %vm330, %v669, %v670
    %v680 = vsel %vm330, %v668, %v669
    %v681 = vsel %vm330, %v667, %v668
    %v682 = vsel %vm330, %v674, %v667
    %v683 = vmul.f32 %v681, %v281
    %v684 = vmul.f32 %v680, %v282
    %v685 = vmul.f32 %v679, %v283
    %v686 = vmul.f32 %v678, %v284
    %v687 = vmul.f32 %v677, %v285
    %v688 = vmul.f32 %v676, %v286
    %v689 = vmul.f32 %v675, %v287
    %v690 = vmul.f32 %v682, %v288
    %691 = vrot.lane.b32.xlu0 %v635, 16
    %v692 = vpop.permute.xlu0 %691
    %693 = vrot.lane.b32.xlu0 %v636, 16
    %v694 = vpop.permute.xlu0 %693
    %695 = vrot.lane.b32.xlu0 %v637, 16
    %v696 = vpop.permute.xlu0 %695
    %697 = vrot.lane.b32.xlu0 %v638, 16
    %v698 = vpop.permute.xlu0 %697
    %699 = vrot.lane.b32.xlu0 %v639, 16
    %v700 = vpop.permute.xlu0 %699
    %701 = vrot.lane.b32.xlu0 %v640, 16
    %v702 = vpop.permute.xlu0 %701
    %703 = vrot.lane.b32.xlu0 %v641, 16
    %v704 = vpop.permute.xlu0 %703
    %705 = vrot.lane.b32.xlu0 %v642, 16
    %v706 = vpop.permute.xlu0 %705
    %v707 = vadd.f32 %v659, %v692
    %v708 = vadd.f32 %v660, %v694
    %v709 = vadd.f32 %v661, %v696
    %v710 = vadd.f32 %v662, %v698
    %v711 = vadd.f32 %v663, %v700
    %v712 = vadd.f32 %v664, %v702
    %v713 = vadd.f32 %v665, %v704
    %v714 = vadd.f32 %v666, %v706
    %715 = vrot.lane.b32.xlu0 %v683, 32
    %v716 = vpop.permute.xlu0 %715
    %717 = vrot.lane.b32.xlu0 %v684, 32
    %v718 = vpop.permute.xlu0 %717
    %719 = vrot.lane.b32.xlu0 %v685, 32
    %v720 = vpop.permute.xlu0 %719
    %721 = vrot.lane.b32.xlu0 %v686, 32
    %v722 = vpop.permute.xlu0 %721
    %723 = vrot.lane.b32.xlu0 %v687, 32
    %v724 = vpop.permute.xlu0 %723
    %725 = vrot.lane.b32.xlu0 %v688, 32
    %v726 = vpop.permute.xlu0 %725
    %727 = vrot.lane.b32.xlu0 %v689, 32
    %v728 = vpop.permute.xlu0 %727
    %729 = vrot.lane.b32.xlu0 %v690, 32
    %v730 = vpop.permute.xlu0 %729
    %v731 = vadd.f32 %v707, %v716
    %v732 = vadd.f32 %v708, %v718
    %v733 = vadd.f32 %v709, %v720
    %v734 = vadd.f32 %v710, %v722
    %v735 = vadd.f32 %v711, %v724
    %v736 = vadd.f32 %v712, %v726
    %v737 = vadd.f32 %v713, %v728
    %v738 = vadd.f32 %v714, %v730
    %v739 = vld [vmem:[#allocation7] sm:$0xff]
    %v740 = vld [vmem:[#allocation7 + $0x8] sm:$0xff]
    %v741 = vld [vmem:[#allocation7 + $0x10] sm:$0xff]
    %v742 = vld [vmem:[#allocation7 + $0x18] sm:$0xff]
    %v743 = vld [vmem:[#allocation7 + $0x20] sm:$0xff]
    %v744 = vld [vmem:[#allocation7 + $0x28] sm:$0xff]
    %v745 = vld [vmem:[#allocation7 + $0x30] sm:$0xff]
    %v746 = vld [vmem:[#allocation7 + $0x38] sm:$0xff]
    %v747 = vld [vmem:[#allocation7 + $0x40] sm:$0xff]
    %v748 = vld [vmem:[#allocation7 + $0x48] sm:$0xff]
    %v749 = vld [vmem:[#allocation7 + $0x50] sm:$0xff]
    %v750 = vld [vmem:[#allocation7 + $0x58] sm:$0xff]
    %v751 = vld [vmem:[#allocation7 + $0x60] sm:$0xff]
    %v752 = vld [vmem:[#allocation7 + $0x68] sm:$0xff]
    %v753 = vld [vmem:[#allocation7 + $0x70] sm:$0xff]
    %v754 = vld [vmem:[#allocation7 + $0x78] sm:$0xff]
    %755 = vmatprep.subr.mxu0 0.0
    %756 = vmatpush1.msra.mxu0 %v739
    %757 = vmatprep.subr.mxu0 0.0
    %758 = vmatpush1.msra.mxu0 %v740
    %759 = vmatprep.subr.mxu0 0.0
    %760 = vmatpush1.msra.mxu0 %v741
    %761 = vmatprep.subr.mxu0 0.0
    %762 = vmatpush1.msra.mxu0 %v742
    %763 = vmatprep.subr.mxu0 0.0
    %764 = vmatpush1.msra.mxu0 %v743
    %765 = vmatprep.subr.mxu0 0.0
    %766 = vmatpush1.msra.mxu0 %v744
    %767 = vmatprep.subr.mxu0 0.0
    %768 = vmatpush1.msra.mxu0 %v745
    %769 = vmatprep.subr.mxu0 0.0
    %770 = vmatpush1.msra.mxu0 %v746
    %771 = vmatprep.subr.mxu0 0.0
    %772 = vmatpush1.msra.mxu0 %v747
    %773 = vmatprep.subr.mxu0 0.0
    %774 = vmatpush1.msra.mxu0 %v748
    %775 = vmatprep.subr.mxu0 0.0
    %776 = vmatpush1.msra.mxu0 %v749
    %777 = vmatprep.subr.mxu0 0.0
    %778 = vmatpush1.msra.mxu0 %v750
    %779 = vmatprep.subr.mxu0 0.0
    %780 = vmatpush1.msra.mxu0 %v751
    %781 = vmatprep.subr.mxu0 0.0
    %782 = vmatpush1.msra.mxu0 %v752
    %783 = vmatprep.subr.mxu0 0.0
    %784 = vmatpush1.msra.mxu0 %v753
    %785 = vmatprep.subr.mxu0 0.0
    %786 = vmatpush1.msra.mxu0 %v754
    %787 = vmatprep.subr.mxu0 0.0
    %788 = vmatpush1.msra.mxu0 0.0
    %789 = vmatprep.subr.mxu0 0.0
    %790 = vmatpush1.msra.mxu0 0.0
    %791 = vmatprep.subr.mxu0 0.0
    %792 = vmatpush1.msra.mxu0 0.0
    %793 = vmatprep.subr.mxu0 0.0
    %794 = vmatpush1.msra.mxu0 0.0
    %795 = vmatprep.subr.mxu0 0.0
    %796 = vmatpush1.msra.mxu0 0.0
    %797 = vmatprep.subr.mxu0 0.0
    %798 = vmatpush1.msra.mxu0 0.0
    %799 = vmatprep.subr.mxu0 0.0
    %800 = vmatpush1.msra.mxu0 0.0
    %801 = vmatprep.subr.mxu0 0.0
    %802 = vmatpush1.msra.mxu0 0.0
    %803 = vmatprep.subr.mxu0 0.0
    %804 = vmatpush1.msra.mxu0 0.0
    %805 = vmatprep.subr.mxu0 0.0
    %806 = vmatpush1.msra.mxu0 0.0
    %807 = vmatprep.subr.mxu0 0.0
    %808 = vmatpush1.msra.mxu0 0.0
    %809 = vmatprep.subr.mxu0 0.0
    %810 = vmatpush1.msra.mxu0 0.0
    %811 = vmatprep.subr.mxu0 0.0
    %812 = vmatpush1.msra.mxu0 0.0
    %813 = vmatprep.subr.mxu0 0.0
    %814 = vmatpush1.msra.mxu0 0.0
    %815 = vmatprep.subr.mxu0 0.0
    %816 = vmatpush1.msra.mxu0 0.0
    %817 = vmatprep.subr.mxu0 0.0
    %818 = vmatpush1.msra.mxu0 0.0
    %819 = vmatprep.mubr.f32.mxu0 0.0
    %820 = vmatmul.mubr.f32.gmra.mrb[0].mxu0 %v731
    %v821 = vpop.f32.mrb[0].mxu0
    %v822 = vadd.f32 0.0, %v821
    %v823 = vpop.f32.mrb[0].mxu0
    %824 = vmatprep.mubr.f32.mxu0 0.0
    %825 = vmatmul.mubr.f32.gmra.mrb[0].mxu0 %v732
    %v826 = vpop.f32.mrb[0].mxu0
    %v827 = vadd.f32 0.0, %v826
    %v828 = vpop.f32.mrb[0].mxu0
    %829 = vmatprep.mubr.f32.mxu0 0.0
    %830 = vmatmul.mubr.f32.gmra.mrb[0].mxu0 %v733
    %v831 = vpop.f32.mrb[0].mxu0
    %v832 = vadd.f32 0.0, %v831
    %v833 = vpop.f32.mrb[0].mxu0
    %834 = vmatprep.mubr.f32.mxu0 0.0
    %835 = vmatmul.mubr.f32.gmra.mrb[0].mxu0 %v734
    %v836 = vpop.f32.mrb[0].mxu0
    %v837 = vadd.f32 0.0, %v836
    %v838 = vpop.f32.mrb[0].mxu0
    %839 = vmatprep.mubr.f32.mxu0 0.0
    %840 = vmatmul.mubr.f32.gmra.mrb[0].mxu0 %v735
    %v841 = vpop.f32.mrb[0].mxu0
    %v842 = vadd.f32 0.0, %v841
    %v843 = vpop.f32.mrb[0].mxu0
    %844 = vmatprep.mubr.f32.mxu0 0.0
    %845 = vmatmul.mubr.f32.gmra.mrb[0].mxu0 %v736
    %v846 = vpop.f32.mrb[0].mxu0
    %v847 = vadd.f32 0.0, %v846
    %v848 = vpop.f32.mrb[0].mxu0
    %849 = vmatprep.mubr.f32.mxu0 0.0
    %850 = vmatmul.mubr.f32.gmra.mrb[0].mxu0 %v737
    %v851 = vpop.f32.mrb[0].mxu0
    %v852 = vadd.f32 0.0, %v851
    %v853 = vpop.f32.mrb[0].mxu0
    %854 = vmatprep.mubr.f32.mxu0 0.0
    %855 = vmatmul.mubr.f32.gmra.mrb[0].mxu0 %v738
    %v856 = vpop.f32.mrb[0].mxu0
    %v857 = vadd.f32 0.0, %v856
    %v858 = vpop.f32.mrb[0].mxu0
    %859 = vdwg.mxu0
    %v860 = vadd.f32 %v822, %v827
    %v861 = vadd.f32 %v860, %v832
    %v862 = vadd.f32 %v861, %v837
    %v863 = vadd.f32 %v862, %v842
    %v864 = vadd.f32 %v863, %v847
    %v865 = vadd.f32 %v864, %v852
    %v866 = vadd.f32 %v865, %v857
    %v867 = vrot.slane %v866, 4
    %v868 = vadd.f32 %v866, %v867
    %v869 = vrot.slane %v868, 2
    %v870 = vadd.f32 %v868, %v869
    %v871 = vrot.slane %v870, 1
    %v872 = vadd.f32 %v870, %v871
    %v873 = vmul.f32 %v872, 0.015625
    %v874 = vsub.f32 %v822, %v873
    %v875 = vsub.f32 %v827, %v873
    %v876 = vsub.f32 %v832, %v873
    %v877 = vsub.f32 %v837, %v873
    %v878 = vsub.f32 %v842, %v873
    %v879 = vsub.f32 %v847, %v873
    %v880 = vsub.f32 %v852, %v873
    %v881 = vsub.f32 %v857, %v873
    %v882 = vmul.f32 %v874, %v874
    %v883 = vmul.f32 %v875, %v875
    %v884 = vmul.f32 %v876, %v876
    %v885 = vmul.f32 %v877, %v877
    %v886 = vmul.f32 %v878, %v878
    %v887 = vmul.f32 %v879, %v879
    %v888 = vmul.f32 %v880, %v880
    %v889 = vmul.f32 %v881, %v881
    %v890 = vadd.f32 %v882, %v883
    %v891 = vadd.f32 %v890, %v884
    %v892 = vadd.f32 %v891, %v885
    %v893 = vadd.f32 %v892, %v886
    %v894 = vadd.f32 %v893, %v887
    %v895 = vadd.f32 %v894, %v888
    %v896 = vadd.f32 %v895, %v889
    %v897 = vrot.slane %v896, 4
    %v898 = vadd.f32 %v896, %v897
    %v899 = vrot.slane %v898, 2
    %v900 = vadd.f32 %v898, %v899
    %v901 = vrot.slane %v900, 1
    %v902 = vadd.f32 %v900, %v901
    %v903 = vmul.f32 %v902, 0.015625
    %v904 = vld [vmem:[%s5] sm:$0x1]
    %v905 = vadd.f32 %v903, 1e-05
    %v906 = vrsqrt.pop %v905
    %v907 = vmul.f32 %v904, %v906
    %v908 = vld [vmem:[%s6] sm:$0x1]
    %v909 = vmul.f32 %v873, %v907
    %v910 = vsub.f32 %v908, %v909
    %v912 = vlaneseq
    %v913 = vshrl.u32 %v912, 7
    %v914 = vsub.s32 0, %v913
    %v915 = vrot.slane %v907, %v914
    %v917 = vmul.f32 %v822, %v915
    %v918 = vmul.f32 %v827, %v915
    %v919 = vmul.f32 %v832, %v915
    %v920 = vmul.f32 %v837, %v915
    %v921 = vmul.f32 %v842, %v915
    %v922 = vmul.f32 %v847, %v915
    %v923 = vmul.f32 %v852, %v915
    %v924 = vmul.f32 %v857, %v915
    %v926 = vlaneseq
    %v927 = vshrl.u32 %v926, 7
    %v928 = vsub.s32 0, %v927
    %v929 = vrot.slane %v910, %v928
    %v931 = vadd.f32 %v917, %v929
    %v932 = vadd.f32 %v918, %v929
    %v933 = vadd.f32 %v919, %v929
    %v934 = vadd.f32 %v920, %v929
    %v935 = vadd.f32 %v921, %v929
    %v936 = vadd.f32 %v922, %v929
    %v937 = vadd.f32 %v923, %v929
    %v938 = vadd.f32 %v924, %v929
    %v939 = vmul.f32 %v931, 0.5
    %v940 = vmul.f32 %v932, 0.5
    %v941 = vmul.f32 %v933, 0.5
    %v942 = vmul.f32 %v934, 0.5
    %v943 = vmul.f32 %v935, 0.5
    %v944 = vmul.f32 %v936, 0.5
    %v945 = vmul.f32 %v937, 0.5
    %v946 = vmul.f32 %v938, 0.5
    %v947 = vmul.f32 %v931, 0.70710677
    %v948 = vmul.f32 %v932, 0.70710677
    %v949 = vmul.f32 %v933, 0.70710677
    %v950 = vmul.f32 %v934, 0.70710677
    %v951 = vmul.f32 %v935, 0.70710677
    %v952 = vmul.f32 %v936, 0.70710677
    %v953 = vmul.f32 %v937, 0.70710677
    %v954 = vmul.f32 %v938, 0.70710677
    %v955 = verf.f32.pop %v947
    %v956 = verf.f32.pop %v948
    %v957 = verf.f32.pop %v949
    %v958 = verf.f32.pop %v950
    %v959 = verf.f32.pop %v951
    %v960 = verf.f32.pop %v952
    %v961 = verf.f32.pop %v953
    %v962 = verf.f32.pop %v954
    %v963 = vadd.f32 %v955, 1.0
    %v964 = vadd.f32 %v956, 1.0
    %v965 = vadd.f32 %v957, 1.0
    %v966 = vadd.f32 %v958, 1.0
    %v967 = vadd.f32 %v959, 1.0
    %v968 = vadd.f32 %v960, 1.0
    %v969 = vadd.f32 %v961, 1.0
    %v970 = vadd.f32 %v962, 1.0
    %v971 = vmul.f32 %v939, %v963
    %v972 = vmul.f32 %v940, %v964
    %v973 = vmul.f32 %v941, %v965
    %v974 = vmul.f32 %v942, %v966
    %v975 = vmul.f32 %v943, %v967
    %v976 = vmul.f32 %v944, %v968
    %v977 = vmul.f32 %v945, %v969
    %v978 = vmul.f32 %v946, %v970
    %v979 = vadd.f32 %v971, %v635
    %v980 = vadd.f32 %v972, %v636
    %v981 = vadd.f32 %v973, %v637
    %v982 = vadd.f32 %v974, %v638
    %v983 = vadd.f32 %v975, %v639
    %v984 = vadd.f32 %v976, %v640
    %v985 = vadd.f32 %v977, %v641
    %v986 = vadd.f32 %v978, %v642
    %v987 = vrot.slane %v979, 6
    %v988 = vrot.slane %v980, 6
    %v989 = vrot.slane %v981, 6
    %v990 = vrot.slane %v982, 6
    %v991 = vrot.slane %v983, 6
    %v992 = vrot.slane %v984, 6
    %v993 = vrot.slane %v985, 6
    %v994 = vrot.slane %v986, 6
    %v995 = vsel %vm305, %v993, %v994
    %v996 = vsel %vm305, %v992, %v993
    %v997 = vsel %vm305, %v991, %v992
    %v998 = vsel %vm305, %v990, %v991
    %v999 = vsel %vm305, %v989, %v990
    %v1000 = vsel %vm305, %v988, %v989
    %v1001 = vsel %vm305, %v987, %v988
    %v1002 = vsel %vm305, %v994, %v987
    %v1003 = vmul.f32 %v1002, %v233
    %v1004 = vmul.f32 %v1001, %v234
    %v1005 = vmul.f32 %v1000, %v235
    %v1006 = vmul.f32 %v999, %v236
    %v1007 = vmul.f32 %v998, %v237
    %v1008 = vmul.f32 %v997, %v238
    %v1009 = vmul.f32 %v996, %v239
    %v1010 = vmul.f32 %v995, %v240
    %v1011 = vrot.slane %v979, 2
    %v1012 = vrot.slane %v980, 2
    %v1013 = vrot.slane %v981, 2
    %v1014 = vrot.slane %v982, 2
    %v1015 = vrot.slane %v983, 2
    %v1016 = vrot.slane %v984, 2
    %v1017 = vrot.slane %v985, 2
    %v1018 = vrot.slane %v986, 2
    %v1019 = vsel %vm330, %v1017, %v1018
    %v1020 = vsel %vm330, %v1016, %v1017
    %v1021 = vsel %vm330, %v1015, %v1016
    %v1022 = vsel %vm330, %v1014, %v1015
    %v1023 = vsel %vm330, %v1013, %v1014
    %v1024 = vsel %vm330, %v1012, %v1013
    %v1025 = vsel %vm330, %v1011, %v1012
    %v1026 = vsel %vm330, %v1018, %v1011
    %v1027 = vmul.f32 %v1025, %v281
    %v1028 = vmul.f32 %v1024, %v282
    %v1029 = vmul.f32 %v1023, %v283
    %v1030 = vmul.f32 %v1022, %v284
    %v1031 = vmul.f32 %v1021, %v285
    %v1032 = vmul.f32 %v1020, %v286
    %v1033 = vmul.f32 %v1019, %v287
    %v1034 = vmul.f32 %v1026, %v288
    %1035 = vrot.lane.b32.xlu0 %v979, 16
    %v1036 = vpop.permute.xlu0 %1035
    %1037 = vrot.lane.b32.xlu0 %v980, 16
    %v1038 = vpop.permute.xlu0 %1037
    %1039 = vrot.lane.b32.xlu0 %v981, 16
    %v1040 = vpop.permute.xlu0 %1039
    %1041 = vrot.lane.b32.xlu0 %v982, 16
    %v1042 = vpop.permute.xlu0 %1041
    %1043 = vrot.lane.b32.xlu0 %v983, 16
    %v1044 = vpop.permute.xlu0 %1043
    %1045 = vrot.lane.b32.xlu0 %v984, 16
    %v1046 = vpop.permute.xlu0 %1045
    %1047 = vrot.lane.b32.xlu0 %v985, 16
    %v1048 = vpop.permute.xlu0 %1047
    %1049 = vrot.lane.b32.xlu0 %v986, 16
    %v1050 = vpop.permute.xlu0 %1049
    %v1051 = vadd.f32 %v1003, %v1036
    %v1052 = vadd.f32 %v1004, %v1038
    %v1053 = vadd.f32 %v1005, %v1040
    %v1054 = vadd.f32 %v1006, %v1042
    %v1055 = vadd.f32 %v1007, %v1044
    %v1056 = vadd.f32 %v1008, %v1046
    %v1057 = vadd.f32 %v1009, %v1048
    %v1058 = vadd.f32 %v1010, %v1050
    %1059 = vrot.lane.b32.xlu0 %v1027, 32
    %v1060 = vpop.permute.xlu0 %1059
    %1061 = vrot.lane.b32.xlu0 %v1028, 32
    %v1062 = vpop.permute.xlu0 %1061
    %1063 = vrot.lane.b32.xlu0 %v1029, 32
    %v1064 = vpop.permute.xlu0 %1063
    %1065 = vrot.lane.b32.xlu0 %v1030, 32
    %v1066 = vpop.permute.xlu0 %1065
    %1067 = vrot.lane.b32.xlu0 %v1031, 32
    %v1068 = vpop.permute.xlu0 %1067
    %1069 = vrot.lane.b32.xlu0 %v1032, 32
    %v1070 = vpop.permute.xlu0 %1069
    %1071 = vrot.lane.b32.xlu0 %v1033, 32
    %v1072 = vpop.permute.xlu0 %1071
    %1073 = vrot.lane.b32.xlu0 %v1034, 32
    %v1074 = vpop.permute.xlu0 %1073
    %v1075 = vadd.f32 %v1051, %v1060
    %v1076 = vadd.f32 %v1052, %v1062
    %v1077 = vadd.f32 %v1053, %v1064
    %v1078 = vadd.f32 %v1054, %v1066
    %v1079 = vadd.f32 %v1055, %v1068
    %v1080 = vadd.f32 %v1056, %v1070
    %v1081 = vadd.f32 %v1057, %v1072
    %v1082 = vadd.f32 %v1058, %v1074
    %v1083 = vld [vmem:[#allocation8] sm:$0xff]
    %v1084 = vld [vmem:[#allocation8 + $0x8] sm:$0xff]
    %v1085 = vld [vmem:[#allocation8 + $0x10] sm:$0xff]
    %v1086 = vld [vmem:[#allocation8 + $0x18] sm:$0xff]
    %v1087 = vld [vmem:[#allocation8 + $0x20] sm:$0xff]
    %v1088 = vld [vmem:[#allocation8 + $0x28] sm:$0xff]
    %v1089 = vld [vmem:[#allocation8 + $0x30] sm:$0xff]
    %v1090 = vld [vmem:[#allocation8 + $0x38] sm:$0xff]
    %v1091 = vld [vmem:[#allocation8 + $0x40] sm:$0xff]
    %v1092 = vld [vmem:[#allocation8 + $0x48] sm:$0xff]
    %v1093 = vld [vmem:[#allocation8 + $0x50] sm:$0xff]
    %v1094 = vld [vmem:[#allocation8 + $0x58] sm:$0xff]
    %v1095 = vld [vmem:[#allocation8 + $0x60] sm:$0xff]
    %v1096 = vld [vmem:[#allocation8 + $0x68] sm:$0xff]
    %v1097 = vld [vmem:[#allocation8 + $0x70] sm:$0xff]
    %v1098 = vld [vmem:[#allocation8 + $0x78] sm:$0xff]
    %v1099 = vld [vmem:[#allocation8 + $0x80] sm:$0xff]
    %v1100 = vld [vmem:[#allocation8 + $0x88] sm:$0xff]
    %v1101 = vld [vmem:[#allocation8 + $0x90] sm:$0xff]
    %v1102 = vld [vmem:[#allocation8 + $0x98] sm:$0xff]
    %v1103 = vld [vmem:[#allocation8 + $0xa0] sm:$0xff]
    %v1104 = vld [vmem:[#allocation8 + $0xa8] sm:$0xff]
    %v1105 = vld [vmem:[#allocation8 + $0xb0] sm:$0xff]
    %v1106 = vld [vmem:[#allocation8 + $0xb8] sm:$0xff]
    %v1107 = vld [vmem:[#allocation8 + $0xc0] sm:$0xff]
    %v1108 = vld [vmem:[#allocation8 + $0xc8] sm:$0xff]
    %v1109 = vld [vmem:[#allocation8 + $0xd0] sm:$0xff]
    %v1110 = vld [vmem:[#allocation8 + $0xd8] sm:$0xff]
    %v1111 = vld [vmem:[#allocation8 + $0xe0] sm:$0xff]
    %v1112 = vld [vmem:[#allocation8 + $0xe8] sm:$0xff]
    %v1113 = vld [vmem:[#allocation8 + $0xf0] sm:$0xff]
    %v1114 = vld [vmem:[#allocation8 + $0xf8] sm:$0xff]
    %v1115 = vld [vmem:[%s8] sm:$0x3]
    %v1117 = vlaneseq
    %v1118 = vshrl.u32 %v1117, 7
    %v1119 = vsub.s32 0, %v1118
    %v1120 = vrot.slane %v1115, %v1119
    %v1121 = vlaneseq
    %v1122 = vshrl.u32 %v1121, 7
    %v1123 = vsub.s32 1, %v1122
    %v1124 = vrot.slane %v1115, %v1123
    %1127 = vmatprep.subr.mxu0 %v1084
    %1128 = vmatpush1.msra.mxu0 %v1083
    %1129 = vmatprep.subr.mxu0 %v1086
    %1130 = vmatpush1.msra.mxu0 %v1085
    %1131 = vmatprep.subr.mxu0 %v1088
    %1132 = vmatpush1.msra.mxu0 %v1087
    %1133 = vmatprep.subr.mxu0 %v1090
    %1134 = vmatpush1.msra.mxu0 %v1089
    %1135 = vmatprep.subr.mxu0 %v1092
    %1136 = vmatpush1.msra.mxu0 %v1091
    %1137 = vmatprep.subr.mxu0 %v1094
    %1138 = vmatpush1.msra.mxu0 %v1093
    %1139 = vmatprep.subr.mxu0 %v1096
    %1140 = vmatpush1.msra.mxu0 %v1095
    %1141 = vmatprep.subr.mxu0 %v1098
    %1142 = vmatpush1.msra.mxu0 %v1097
    %1143 = vmatprep.subr.mxu0 %v1100
    %1144 = vmatpush1.msra.mxu0 %v1099
    %1145 = vmatprep.subr.mxu0 %v1102
    %1146 = vmatpush1.msra.mxu0 %v1101
    %1147 = vmatprep.subr.mxu0 %v1104
    %1148 = vmatpush1.msra.mxu0 %v1103
    %1149 = vmatprep.subr.mxu0 %v1106
    %1150 = vmatpush1.msra.mxu0 %v1105
    %1151 = vmatprep.subr.mxu0 %v1108
    %1152 = vmatpush1.msra.mxu0 %v1107
    %1153 = vmatprep.subr.mxu0 %v1110
    %1154 = vmatpush1.msra.mxu0 %v1109
    %1155 = vmatprep.subr.mxu0 %v1112
    %1156 = vmatpush1.msra.mxu0 %v1111
    %1157 = vmatprep.subr.mxu0 %v1114
    %1158 = vmatpush1.msra.mxu0 %v1113
    %1159 = vmatprep.subr.mxu0 0.0
    %1160 = vmatpush1.msra.mxu0 0.0
    %1161 = vmatprep.subr.mxu0 0.0
    %1162 = vmatpush1.msra.mxu0 0.0
    %1163 = vmatprep.subr.mxu0 0.0
    %1164 = vmatpush1.msra.mxu0 0.0
    %1165 = vmatprep.subr.mxu0 0.0
    %1166 = vmatpush1.msra.mxu0 0.0
    %1167 = vmatprep.subr.mxu0 0.0
    %1168 = vmatpush1.msra.mxu0 0.0
    %1169 = vmatprep.subr.mxu0 0.0
    %1170 = vmatpush1.msra.mxu0 0.0
    %1171 = vmatprep.subr.mxu0 0.0
    %1172 = vmatpush1.msra.mxu0 0.0
    %1173 = vmatprep.subr.mxu0 0.0
    %1174 = vmatpush1.msra.mxu0 0.0
    %1175 = vmatprep.subr.mxu0 0.0
    %1176 = vmatpush1.msra.mxu0 0.0
    %1177 = vmatprep.subr.mxu0 0.0
    %1178 = vmatpush1.msra.mxu0 0.0
    %1179 = vmatprep.subr.mxu0 0.0
    %1180 = vmatpush1.msra.mxu0 0.0
    %1181 = vmatprep.subr.mxu0 0.0
    %1182 = vmatpush1.msra.mxu0 0.0
    %1183 = vmatprep.subr.mxu0 0.0
    %1184 = vmatpush1.msra.mxu0 0.0
    %1185 = vmatprep.subr.mxu0 0.0
    %1186 = vmatpush1.msra.mxu0 0.0
    %1187 = vmatprep.subr.mxu0 0.0
    %1188 = vmatpush1.msra.mxu0 0.0
    %1189 = vmatprep.subr.mxu0 0.0
    %1190 = vmatpush1.msra.mxu0 0.0
    %1191 = vmatprep.mubr.f32.mxu0 0.0
    %1192 = vmatmul.mubr.f32.gmra.mrb[0].mxu0 %v1075
    %v1193 = vpop.f32.mrb[0].mxu0
    %v1194 = vadd.f32 %v1120, %v1193
    %v1195 = vpop.f32.mrb[0].mxu0
    %v1196 = vadd.f32 %v1124, %v1195
    %1197 = vmatprep.mubr.f32.mxu0 0.0
    %1198 = vmatmul.mubr.f32.gmra.mrb[0].mxu0 %v1076
    %v1199 = vpop.f32.mrb[0].mxu0
    %v1200 = vadd.f32 %v1120, %v1199
    %v1201 = vpop.f32.mrb[0].mxu0
    %v1202 = vadd.f32 %v1124, %v1201
    %1203 = vmatprep.mubr.f32.mxu0 0.0
    %1204 = vmatmul.mubr.f32.gmra.mrb[0].mxu0 %v1077
    %v1205 = vpop.f32.mrb[0].mxu0
    %v1206 = vadd.f32 %v1120, %v1205
    %v1207 = vpop.f32.mrb[0].mxu0
    %v1208 = vadd.f32 %v1124, %v1207
    %1209 = vmatprep.mubr.f32.mxu0 0.0
    %1210 = vmatmul.mubr.f32.gmra.mrb[0].mxu0 %v1078
    %v1211 = vpop.f32.mrb[0].mxu0
    %v1212 = vadd.f32 %v1120, %v1211
    %v1213 = vpop.f32.mrb[0].mxu0
    %v1214 = vadd.f32 %v1124, %v1213
    %1215 = vmatprep.mubr.f32.mxu0 0.0
    %1216 = vmatmul.mubr.f32.gmra.mrb[0].mxu0 %v1079
    %v1217 = vpop.f32.mrb[0].mxu0
    %v1218 = vadd.f32 %v1120, %v1217
    %v1219 = vpop.f32.mrb[0].mxu0
    %v1220 = vadd.f32 %v1124, %v1219
    %1221 = vmatprep.mubr.f32.mxu0 0.0
    %1222 = vmatmul.mubr.f32.gmra.mrb[0].mxu0 %v1080
    %v1223 = vpop.f32.mrb[0].mxu0
    %v1224 = vadd.f32 %v1120, %v1223
    %v1225 = vpop.f32.mrb[0].mxu0
    %v1226 = vadd.f32 %v1124, %v1225
    %1227 = vmatprep.mubr.f32.mxu0 0.0
    %1228 = vmatmul.mubr.f32.gmra.mrb[0].mxu0 %v1081
    %v1229 = vpop.f32.mrb[0].mxu0
    %v1230 = vadd.f32 %v1120, %v1229
    %v1231 = vpop.f32.mrb[0].mxu0
    %v1232 = vadd.f32 %v1124, %v1231
    %1233 = vmatprep.mubr.f32.mxu0 0.0
    %1234 = vmatmul.mubr.f32.gmra.mrb[0].mxu0 %v1082
    %v1235 = vpop.f32.mrb[0].mxu0
    %v1236 = vadd.f32 %v1120, %v1235
    %v1237 = vpop.f32.mrb[0].mxu0
    %v1238 = vadd.f32 %v1124, %v1237
    %1239 = vdwg.mxu0
    %v1240 = vxor.u32 %v1196, 2147483648
    %v1241 = vxor.u32 %v1202, 2147483648
    %v1242 = vxor.u32 %v1208, 2147483648
    %v1243 = vxor.u32 %v1214, 2147483648
    %v1244 = vxor.u32 %v1220, 2147483648
    %v1245 = vxor.u32 %v1226, 2147483648
    %v1246 = vxor.u32 %v1232, 2147483648
    %v1247 = vxor.u32 %v1238, 2147483648
    %v1248 = vmul.f32 %v1240, 1.442695
    %v1249 = vpow.pop %v1248
    %v1250 = vmul.f32 %v1241, 1.442695
    %v1251 = vpow.pop %v1250
    %v1252 = vmul.f32 %v1242, 1.442695
    %v1253 = vpow.pop %v1252
    %v1254 = vmul.f32 %v1243, 1.442695
    %v1255 = vpow.pop %v1254
    %v1256 = vmul.f32 %v1244, 1.442695
    %v1257 = vpow.pop %v1256
    %v1258 = vmul.f32 %v1245, 1.442695
    %v1259 = vpow.pop %v1258
    %v1260 = vmul.f32 %v1246, 1.442695
    %v1261 = vpow.pop %v1260
    %v1262 = vmul.f32 %v1247, 1.442695
    %v1263 = vpow.pop %v1262
    %v1264 = vadd.f32 %v1249, 1.0
    %v1265 = vadd.f32 %v1251, 1.0
    %v1266 = vadd.f32 %v1253, 1.0
    %v1267 = vadd.f32 %v1255, 1.0
    %v1268 = vadd.f32 %v1257, 1.0
    %v1269 = vadd.f32 %v1259, 1.0
    %v1270 = vadd.f32 %v1261, 1.0
    %v1271 = vadd.f32 %v1263, 1.0
    %v1272 = vrcp.pop %v1264
    %v1273 = vmul.f32 1.0, %v1272
    %v1274 = vrcp.pop %v1265
    %v1275 = vmul.f32 1.0, %v1274
    %v1276 = vrcp.pop %v1266
    %v1277 = vmul.f32 1.0, %v1276
    %v1278 = vrcp.pop %v1267
    %v1279 = vmul.f32 1.0, %v1278
    %v1280 = vrcp.pop %v1268
    %v1281 = vmul.f32 1.0, %v1280
    %v1282 = vrcp.pop %v1269
    %v1283 = vmul.f32 1.0, %v1282
    %v1284 = vrcp.pop %v1270
    %v1285 = vmul.f32 1.0, %v1284
    %v1286 = vrcp.pop %v1271
    %v1287 = vmul.f32 1.0, %v1286
    %v1288 = vmul.f32 %v1194, %v1273
    %v1289 = vmul.f32 %v1200, %v1275
    %v1290 = vmul.f32 %v1206, %v1277
    %v1291 = vmul.f32 %v1212, %v1279
    %v1292 = vmul.f32 %v1218, %v1281
    %v1293 = vmul.f32 %v1224, %v1283
    %v1294 = vmul.f32 %v1230, %v1285
    %v1295 = vmul.f32 %v1236, %v1287
    %1296 = vst [vmem:[#allocation10] sm:$0xff] %v1288
    %1297 = vst [vmem:[#allocation10 + $0x8] sm:$0xff] %v1289
    %1298 = vst [vmem:[#allocation10 + $0x10] sm:$0xff] %v1290
    %1299 = vst [vmem:[#allocation10 + $0x18] sm:$0xff] %v1291
    %1300 = vst [vmem:[#allocation10 + $0x20] sm:$0xff] %v1292
    %1301 = vst [vmem:[#allocation10 + $0x28] sm:$0xff] %v1293
    %1302 = vst [vmem:[#allocation10 + $0x30] sm:$0xff] %v1294
    %1303 = vst [vmem:[#allocation10 + $0x38] sm:$0xff] %v1295
    // Predicated region
    $region54: #{tpu_custom_call.1} parent=1 // pred_check
      _
    $region55: #{tpu_custom_call.1} parent=1 // pred_check_branch
      %1305 = sbr.rel (0) target = $region57
    $region56: #{tpu_custom_call.1} parent=1 // pred_region
      %s1307 = ssub.s32 1024, 1024
      %1308 = vsyncadd [#allocation4], %s1307
      %s1309 = sshll.u32 [#allocation10], 4
      %s1310 = int_to_ptr.vmem [resolvable:$true] %s1309
      %1315 = dma.vmem_to_hbm [thread:$0]  %s1310, 1024, %s9, [#allocation4], 128, 128, 8
    $region57: #{tpu_custom_call.1} parent=1 // pred_fallthru
      _
    // Predicated region
    $region58: #{tpu_custom_call.1} parent=1 // pred_check
      _
    $region59: #{tpu_custom_call.1} parent=1 // pred_check_branch
      %1317 = sbr.rel (0) target = $region61
    $region60: #{tpu_custom_call.1} parent=1 // pred_region
      %1318 = dma.done [#allocation4], 1024
    $region61: #{tpu_custom_call.1} parent=1 // pred_fallthru
      _
    %1319 = vsyncpa [#allocation3], 1
    %1320 = vsyncpa [#allocation6], 1
    %1321 = vsyncpa [#allocation9], 1
    %1322 = vsyncpa [#allocation4], 1

</llo_original>
